<compile_context>
chip_gen: v7x
topology: tpu7x:2x2x1
jax: 0.10.0
libtpu: 0.0.40
codegen_flags: <defaults>
</compile_context>

<pallas_src>
import jax
import jax.numpy as jnp
from jax.experimental import pallas as pl
from jax.experimental.pallas import tpu as pltpu


LANE = 128


def _round_up(x, m):
    return ((x + m - 1) // m) * m


def _const_spec(shape):
    # Whole-array block; same block for every grid point -> weights stay
    # resident in VMEM after the first grid iteration.
    return pl.BlockSpec(shape, lambda b, s: (0,) * len(shape))


# ---------------------------------------------------------------------------
# Fused per-step kernel: L LSTM cells + Linear head, state carried in scratch.
# ---------------------------------------------------------------------------
def make_lstm_step_kernel(layer_num, hidden_pad, data_pad):
    L, Hp = layer_num, hidden_pad

    def kernel(*refs):
        # inputs
        x_ref = refs[0]
        w_ih_refs = refs[1:1 + L]              # (Din_pad, 4*Hp) bf16
        w_hh_refs = refs[1 + L:1 + 2 * L]      # (Hp, 4*Hp)      bf16
        b_refs = refs[1 + 2 * L:1 + 3 * L]     # (1, 4*Hp)       f32
        fc_w_ref = refs[1 + 3 * L]             # (Hp, Dp)        bf16
        fc_b_ref = refs[2 + 3 * L]             # (1, Dp)         f32
        # output
        y_ref = refs[3 + 3 * L]                # (1, Bt, Dp)     f32
        # scratch (persists across grid steps)
        h_sc = refs[4 + 3 * L]                 # (L, Bt, Hp)     f32
        c_sc = refs[5 + 3 * L]                 # (L, Bt, Hp)     f32
        in_sc = refs[6 + 3 * L]                # (Bt, Dp)        f32

        step = pl.program_id(1)

        @pl.when(step == 0)
        def _init():
            h_sc[...] = jnp.zeros_like(h_sc)
            c_sc[...] = jnp.zeros_like(c_sc)
            in_sc[...] = x_ref[...]

        layer_in = in_sc[...]
        for l in range(L):
            w_dt = w_ih_refs[l].dtype
            # Two MXU pushes (no lane concat), f32 accumulation.
            gates = (
                jnp.dot(layer_in.astype(w_dt), w_ih_refs[l][...],
                        preferred_element_type=jnp.float32)
                + jnp.dot(h_sc[l].astype(w_dt), w_hh_refs[l][...],
                          preferred_element_type=jnp.float32)
                + b_refs[l][...])
            # One full-vreg sigmoid over 4*Hp; g-gate pre-activations were
            # pre-scaled by 2 at init, so tanh(z) = 2*sigmoid(2z) - 1.
            sg = jax.nn.sigmoid(gates)
            i = sg[:, 0 * Hp:1 * Hp]
            f = sg[:, 1 * Hp:2 * Hp]
            g = 2.0 * sg[:, 2 * Hp:3 * Hp] - 1.0
            o = sg[:, 3 * Hp:4 * Hp]
            c_new = f * c_sc[l] + i * g
            h_new = o * jnp.tanh(c_new)
            c_sc[l] = c_new
            h_sc[l] = h_new
            layer_in = h_new
            # TODO(synk): inter-layer dropout (p=0.01) omitted (eval mode).

        y = (jnp.dot(layer_in.astype(fc_w_ref.dtype), fc_w_ref[...],
                     preferred_element_type=jnp.float32) + fc_b_ref[...])
        y_ref[0] = y          # lane-dense (Dp = multiple of 128) store
        in_sc[...] = y        # autoregressive feedback for the next step

    return kernel


# ---------------------------------------------------------------------------
# Parameter init (deterministic; mimics normal_init on all weights/biases).
# Pads hidden/data dims to multiples of 128 and pre-scales the g-gate block.
# ---------------------------------------------------------------------------
def init_params(key, data_dim, hidden_dim, layer_num, std=0.02,
                weight_dtype=jnp.bfloat16):
    Hp = _round_up(hidden_dim, LANE)
    Dp = _round_up(data_dim, LANE)
    H = hidden_dim

    def pad_gate_cols(w_t):
        # w_t: (Din, 4H), PyTorch gate order [i, f, g, o] along columns.
        blocks = []
        for k in range(4):
            blk = w_t[:, k * H:(k + 1) * H]
            if k == 2:                       # g gate: tanh(z) = 2*sigmoid(2z)-1
                blk = blk * 2.0
            blocks.append(jnp.pad(blk, ((0, 0), (0, Hp - H))))
        return jnp.concatenate(blocks, axis=1)          # (Din, 4*Hp)

    def pad_gate_bias(b):
        blocks = []
        for k in range(4):
            blk = b[k * H:(k + 1) * H]
            if k == 2:
                blk = blk * 2.0
            blocks.append(jnp.pad(blk, (0, Hp - H)))
        return jnp.concatenate(blocks).reshape(1, -1)    # (1, 4*Hp)

    layers = []
    for l in range(layer_num):
        in_dim = data_dim if l == 0 else hidden_dim
        in_pad = Dp if l == 0 else Hp
        key, k1, k2, k3, k4 = jax.random.split(key, 5)
        w_ih = jax.random.normal(k1, (4 * H, in_dim), jnp.float32) * std
        w_hh = jax.random.normal(k2, (4 * H, H), jnp.float32) * std
        b_ih = jax.random.normal(k3, (4 * H,), jnp.float32) * std
        b_hh = jax.random.normal(k4, (4 * H,), jnp.float32) * std
        w_ih_t = pad_gate_cols(w_ih.T)
        w_ih_t = jnp.pad(w_ih_t, ((0, in_pad - in_dim), (0, 0)))
        w_hh_t = pad_gate_cols(w_hh.T)
        w_hh_t = jnp.pad(w_hh_t, ((0, Hp - H), (0, 0)))
        layers.append({
            "w_ih": w_ih_t.astype(weight_dtype),                  # (in_pad, 4*Hp)
            "w_hh": w_hh_t.astype(weight_dtype),                  # (Hp, 4*Hp)
            "b": pad_gate_bias(b_ih + b_hh).astype(jnp.float32),  # (1, 4*Hp)
        })
    key, k1, k2 = jax.random.split(key, 3)
    w_fc = jax.random.normal(k1, (data_dim, hidden_dim), jnp.float32) * std
    b_fc = jax.random.normal(k2, (data_dim,), jnp.float32) * std
    fc_w = jnp.pad(w_fc.T, ((0, Hp - hidden_dim), (0, Dp - data_dim)))
    fc_b = jnp.pad(b_fc, (0, Dp - data_dim)).reshape(1, -1)
    return {
        "layers": layers,
        "fc_w": fc_w.astype(weight_dtype),       # (Hp, Dp)
        "fc_b": fc_b.astype(jnp.float32),        # (1, Dp)
    }


# ---------------------------------------------------------------------------
# Forward pass (matches LSTM.forward(x, n)) -- one pallas_call, jitted.
# ---------------------------------------------------------------------------
def lstm_forward(params, x, *, hidden_dim, layer_num, n=1, batch_tile=None):
    B, data_dim = x.shape
    Hp = _round_up(hidden_dim, LANE)
    Dp = _round_up(data_dim, LANE)

    if batch_tile is None:
        batch_tile = min(_round_up(B, 8), 256)
    B_pad = _round_up(B, batch_tile)
    nb = B_pad // batch_tile

    x_p = jnp.pad(x, ((0, B_pad - B), (0, Dp - data_dim)))

    args = ([x_p]
            + [params["layers"][l]["w_ih"] for l in range(layer_num)]
            + [params["layers"][l]["w_hh"] for l in range(layer_num)]
            + [params["layers"][l]["b"] for l in range(layer_num)]
            + [params["fc_w"], params["fc_b"]])

    in_specs = ([pl.BlockSpec((batch_tile, Dp), lambda b, s: (b, 0))]
                + [_const_spec(a.shape) for a in args[1:]])
    out_spec = pl.BlockSpec((1, batch_tile, Dp), lambda b, s: (s, b, 0))

    scratch_shapes = [
        pltpu.VMEM((layer_num, batch_tile, Hp), jnp.float32),   # h
        pltpu.VMEM((layer_num, batch_tile, Hp), jnp.float32),   # c
        pltpu.VMEM((batch_tile, Dp), jnp.float32),              # step input
    ]

    # Explicit VMEM budget: resident weights + x + per-step blocks, with
    # double-buffering headroom, clamped to v7x's 64 MiB physical VMEM.
    arg_bytes = sum(int(a.size) * a.dtype.itemsize for a in args)
    scratch_bytes = (2 * layer_num * batch_tile * Hp + batch_tile * Dp) * 4
    needed = 2 * (arg_bytes + batch_tile * Dp * 4) + scratch_bytes + (4 << 20)
    vmem_budget = int(min(max(needed, 32 << 20), 64 << 20))

    y_all = pl.pallas_call(
        make_lstm_step_kernel(layer_num, Hp, Dp),
        out_shape=jax.ShapeDtypeStruct((n, B_pad, Dp), jnp.float32),
        grid=(nb, n),
        in_specs=in_specs,
        out_specs=out_spec,
        scratch_shapes=scratch_shapes,
        compiler_params=pltpu.CompilerParams(
            dimension_semantics=("parallel", "arbitrary"),
            vmem_limit_bytes=vmem_budget),
    )(*args)

    y_list = [y_all[s, :B, :data_dim] for s in range(n)]
    return y_list[-1], y_list


lstm_forward_jit = jax.jit(
    lstm_forward,
    static_argnames=("hidden_dim", "layer_num", "n", "batch_tile"))


if __name__ == "__main__":
    data_dim = 16
    hidden_dim = 32
    layer_num = 2
    batch = 2
    n_steps = 2

    key = jax.random.PRNGKey(0)
    key, kx, kp = jax.random.split(key, 3)
    x = jax.random.normal(kx, (batch, data_dim), jnp.float32)
    params = init_params(kp, data_dim, hidden_dim, layer_num)

    y_last, y_list = lstm_forward_jit(params, x, hidden_dim=hidden_dim,
                                      layer_num=layer_num, n=n_steps)
    y_last = jax.block_until_ready(y_last)
    for y in y_list:
        jax.block_until_ready(y)

    assert y_last.shape == (batch, data_dim)
    assert len(y_list) == n_steps
    assert all(yi.shape == (batch, data_dim) for yi in y_list)
    assert bool(jnp.all(jnp.isfinite(y_last)))
    print("KERNEL_OK")
</pallas_src>

<mosaic_0001>
module attributes {stable_mosaic.version = 11 : i64} {
  func.func @kernel(%arg0: i32, %arg1: i32, %arg2: memref<8x128xf32, #tpu.memory_space<vmem>>, %arg3: memref<128x512xbf16, #tpu.memory_space<vmem>>, %arg4: memref<128x512xbf16, #tpu.memory_space<vmem>>, %arg5: memref<128x512xbf16, #tpu.memory_space<vmem>>, %arg6: memref<128x512xbf16, #tpu.memory_space<vmem>>, %arg7: memref<1x512xf32, #tpu.memory_space<vmem>>, %arg8: memref<1x512xf32, #tpu.memory_space<vmem>>, %arg9: memref<128x128xbf16, #tpu.memory_space<vmem>>, %arg10: memref<1x128xf32, #tpu.memory_space<vmem>>, %arg11: memref<1x8x128xf32, #tpu.memory_space<vmem>>, %arg12: memref<2x8x128xf32, #tpu.memory_space<vmem>>, %arg13: memref<2x8x128xf32, #tpu.memory_space<vmem>>, %arg14: memref<8x128xf32, #tpu.memory_space<vmem>>) attributes {dimension_semantics = [#tpu.dimension_semantics<parallel>, #tpu.dimension_semantics<arbitrary>], iteration_bounds = array<i64: 1, 2>, scalar_prefetch = 0 : i64, scratch_operands = 3 : i64, tpu.core_type = #tpu.core_type<tc>, window_params = [{transform_indices = @transform_0, window_bounds = array<i64: 8, 128>}, {pipeline_mode = #tpu.pipeline_mode<synchronous>, transform_indices = @transform_1, window_bounds = array<i64: 128, 512>}, {pipeline_mode = #tpu.pipeline_mode<synchronous>, transform_indices = @transform_2, window_bounds = array<i64: 128, 512>}, {pipeline_mode = #tpu.pipeline_mode<synchronous>, transform_indices = @transform_3, window_bounds = array<i64: 128, 512>}, {pipeline_mode = #tpu.pipeline_mode<synchronous>, transform_indices = @transform_4, window_bounds = array<i64: 128, 512>}, {pipeline_mode = #tpu.pipeline_mode<synchronous>, transform_indices = @transform_5, window_bounds = array<i64: 1, 512>}, {pipeline_mode = #tpu.pipeline_mode<synchronous>, transform_indices = @transform_6, window_bounds = array<i64: 1, 512>}, {pipeline_mode = #tpu.pipeline_mode<synchronous>, transform_indices = @transform_7, window_bounds = array<i64: 128, 128>}, {pipeline_mode = #tpu.pipeline_mode<synchronous>, transform_indices = @transform_8, window_bounds = array<i64: 1, 128>}, {transform_indices = @transform_9, window_bounds = array<i64: 1, 8, 128>}]} {
    %c0_i32 = arith.constant 0 : i32
    %0 = arith.cmpi eq, %arg1, %c0_i32 : i32
    %1 = arith.extui %0 : i1 to i32
    %c0_i32_0 = arith.constant 0 : i32
    %2 = arith.cmpi ne, %1, %c0_i32_0 : i32
    scf.if %2 {
      %cst_56 = arith.constant 0.000000e+00 : f32
      %90 = vector.broadcast %cst_56 : f32 to vector<2x8x128xf32>
      %c0_57 = arith.constant 0 : index
      %c0_58 = arith.constant 0 : index
      %c0_59 = arith.constant 0 : index
      %91 = vector.load %arg12[%c0_57, %c0_58, %c0_59] : memref<2x8x128xf32, #tpu.memory_space<vmem>>, vector<2x8x128xf32>
      tpu.vector_store %arg12[%c0_57, %c0_58, %c0_59], %90 {strides = array<i32>} : memref<2x8x128xf32, #tpu.memory_space<vmem>>, vector<2x8x128xf32>,
      %cst_60 = arith.constant 0.000000e+00 : f32
      %92 = vector.broadcast %cst_60 : f32 to vector<2x8x128xf32>
      %c0_61 = arith.constant 0 : index
      %c0_62 = arith.constant 0 : index
      %c0_63 = arith.constant 0 : index
      %93 = vector.load %arg13[%c0_61, %c0_62, %c0_63] : memref<2x8x128xf32, #tpu.memory_space<vmem>>, vector<2x8x128xf32>
      tpu.vector_store %arg13[%c0_61, %c0_62, %c0_63], %92 {strides = array<i32>} : memref<2x8x128xf32, #tpu.memory_space<vmem>>, vector<2x8x128xf32>,
      %c0_64 = arith.constant 0 : index
      %c0_65 = arith.constant 0 : index
      %94 = vector.load %arg2[%c0_64, %c0_65] : memref<8x128xf32, #tpu.memory_space<vmem>>, vector<8x128xf32>
      %c0_66 = arith.constant 0 : index
      %c0_67 = arith.constant 0 : index
      %95 = vector.load %arg14[%c0_66, %c0_67] : memref<8x128xf32, #tpu.memory_space<vmem>>, vector<8x128xf32>
      tpu.vector_store %arg14[%c0_66, %c0_67], %94 {strides = array<i32>} : memref<8x128xf32, #tpu.memory_space<vmem>>, vector<8x128xf32>,
    } else {
    }
    %c0 = arith.constant 0 : index
    %c0_1 = arith.constant 0 : index
    %3 = vector.load %arg14[%c0, %c0_1] : memref<8x128xf32, #tpu.memory_space<vmem>>, vector<8x128xf32>
    %4 = arith.truncf %3 : vector<8x128xf32> to vector<8x128xbf16>
    %c0_2 = arith.constant 0 : index
    %c0_3 = arith.constant 0 : index
    %5 = vector.load %arg3[%c0_2, %c0_3] : memref<128x512xbf16, #tpu.memory_space<vmem>>, vector<128x512xbf16>
    %cst = arith.constant dense<0.000000e+00> : vector<8x512xf32>
    %6 = tpu.matmul %4, %5, %cst {dimension_numbers = #tpu.dot_dimension_numbers<[1], [0], [0], [1], [0, 0, 1, 1], [], []>} : vector<8x128xbf16>, vector<128x512xbf16>, vector<8x512xf32> -> vector<8x512xf32>
    %c0_4 = arith.constant 0 : index
    %c0_5 = arith.constant 0 : index
    %c0_6 = arith.constant 0 : index
    %7 = vector.load %arg12[%c0_4, %c0_5, %c0_6] : memref<2x8x128xf32, #tpu.memory_space<vmem>>, vector<1x8x128xf32>
    %8 = vector.shape_cast %7 : vector<1x8x128xf32> to vector<8x128xf32>
    %9 = arith.truncf %8 : vector<8x128xf32> to vector<8x128xbf16>
    %c0_7 = arith.constant 0 : index
    %c0_8 = arith.constant 0 : index
    %10 = vector.load %arg5[%c0_7, %c0_8] : memref<128x512xbf16, #tpu.memory_space<vmem>>, vector<128x512xbf16>
    %cst_9 = arith.constant dense<0.000000e+00> : vector<8x512xf32>
    %11 = tpu.matmul %9, %10, %cst_9 {dimension_numbers = #tpu.dot_dimension_numbers<[1], [0], [0], [1], [0, 0, 1, 1], [], []>} : vector<8x128xbf16>, vector<128x512xbf16>, vector<8x512xf32> -> vector<8x512xf32>
    %12 = arith.addf %6, %11 : vector<8x512xf32>
    %c0_10 = arith.constant 0 : index
    %c0_11 = arith.constant 0 : index
    %13 = vector.load %arg7[%c0_10, %c0_11] : memref<1x512xf32, #tpu.memory_space<vmem>>, vector<1x512xf32>
    %14 = vector.broadcast %13 : vector<1x512xf32> to vector<8x512xf32>
    %15 = arith.addf %12, %14 : vector<8x512xf32>
    %16 = arith.negf %15 : vector<8x512xf32>
    %17 = math.exp %16 : vector<8x512xf32>
    %cst_12 = arith.constant 1.000000e+00 : f32
    %18 = vector.broadcast %cst_12 : f32 to vector<8x512xf32>
    %19 = arith.addf %18, %17 : vector<8x512xf32>
    %20 = arith.divf %18, %19 : vector<8x512xf32>
    %21 = vector.extract_strided_slice %20 {offsets = [0, 0], sizes = [8, 128], strides = [1, 1]} : vector<8x512xf32> to vector<8x128xf32>
    %22 = vector.extract_strided_slice %20 {offsets = [0, 128], sizes = [8, 128], strides = [1, 1]} : vector<8x512xf32> to vector<8x128xf32>
    %23 = vector.extract_strided_slice %20 {offsets = [0, 256], sizes = [8, 128], strides = [1, 1]} : vector<8x512xf32> to vector<8x128xf32>
    %cst_13 = arith.constant 2.000000e+00 : f32
    %24 = vector.broadcast %cst_13 : f32 to vector<8x128xf32>
    %25 = arith.mulf %24, %23 : vector<8x128xf32>
    %cst_14 = arith.constant 1.000000e+00 : f32
    %26 = vector.broadcast %cst_14 : f32 to vector<8x128xf32>
    %27 = arith.subf %25, %26 : vector<8x128xf32>
    %28 = vector.extract_strided_slice %20 {offsets = [0, 384], sizes = [8, 128], strides = [1, 1]} : vector<8x512xf32> to vector<8x128xf32>
    %c0_15 = arith.constant 0 : index
    %c0_16 = arith.constant 0 : index
    %c0_17 = arith.constant 0 : index
    %29 = vector.load %arg13[%c0_15, %c0_16, %c0_17] : memref<2x8x128xf32, #tpu.memory_space<vmem>>, vector<1x8x128xf32>
    %30 = vector.shape_cast %29 : vector<1x8x128xf32> to vector<8x128xf32>
    %31 = arith.mulf %22, %30 : vector<8x128xf32>
    %32 = arith.mulf %21, %27 : vector<8x128xf32>
    %33 = arith.addf %31, %32 : vector<8x128xf32>
    %34 = math.tanh %33 : vector<8x128xf32>
    %35 = arith.mulf %28, %34 : vector<8x128xf32>
    %c0_18 = arith.constant 0 : index
    %c0_19 = arith.constant 0 : index
    %c0_20 = arith.constant 0 : index
    %36 = vector.load %arg13[%c0_18, %c0_19, %c0_20] : memref<2x8x128xf32, #tpu.memory_space<vmem>>, vector<1x8x128xf32>
    %37 = vector.shape_cast %36 : vector<1x8x128xf32> to vector<8x128xf32>
    %38 = vector.shape_cast %33 : vector<8x128xf32> to vector<1x8x128xf32>
    tpu.vector_store %arg13[%c0_18, %c0_19, %c0_20], %38 {strides = array<i32>} : memref<2x8x128xf32, #tpu.memory_space<vmem>>, vector<1x8x128xf32>,
    %c0_21 = arith.constant 0 : index
    %c0_22 = arith.constant 0 : index
    %c0_23 = arith.constant 0 : index
    %39 = vector.load %arg12[%c0_21, %c0_22, %c0_23] : memref<2x8x128xf32, #tpu.memory_space<vmem>>, vector<1x8x128xf32>
    %40 = vector.shape_cast %39 : vector<1x8x128xf32> to vector<8x128xf32>
    %41 = vector.shape_cast %35 : vector<8x128xf32> to vector<1x8x128xf32>
    tpu.vector_store %arg12[%c0_21, %c0_22, %c0_23], %41 {strides = array<i32>} : memref<2x8x128xf32, #tpu.memory_space<vmem>>, vector<1x8x128xf32>,
    %42 = arith.truncf %35 : vector<8x128xf32> to vector<8x128xbf16>
    %c0_24 = arith.constant 0 : index
    %c0_25 = arith.constant 0 : index
    %43 = vector.load %arg4[%c0_24, %c0_25] : memref<128x512xbf16, #tpu.memory_space<vmem>>, vector<128x512xbf16>
    %cst_26 = arith.constant dense<0.000000e+00> : vector<8x512xf32>
    %44 = tpu.matmul %42, %43, %cst_26 {dimension_numbers = #tpu.dot_dimension_numbers<[1], [0], [0], [1], [0, 0, 1, 1], [], []>} : vector<8x128xbf16>, vector<128x512xbf16>, vector<8x512xf32> -> vector<8x512xf32>
    %c1 = arith.constant 1 : index
    %c0_27 = arith.constant 0 : index
    %c0_28 = arith.constant 0 : index
    %45 = vector.load %arg12[%c1, %c0_27, %c0_28] : memref<2x8x128xf32, #tpu.memory_space<vmem>>, vector<1x8x128xf32>
    %46 = vector.shape_cast %45 : vector<1x8x128xf32> to vector<8x128xf32>
    %47 = arith.truncf %46 : vector<8x128xf32> to vector<8x128xbf16>
    %c0_29 = arith.constant 0 : index
    %c0_30 = arith.constant 0 : index
    %48 = vector.load %arg6[%c0_29, %c0_30] : memref<128x512xbf16, #tpu.memory_space<vmem>>, vector<128x512xbf16>
    %cst_31 = arith.constant dense<0.000000e+00> : vector<8x512xf32>
    %49 = tpu.matmul %47, %48, %cst_31 {dimension_numbers = #tpu.dot_dimension_numbers<[1], [0], [0], [1], [0, 0, 1, 1], [], []>} : vector<8x128xbf16>, vector<128x512xbf16>, vector<8x512xf32> -> vector<8x512xf32>
    %50 = arith.addf %44, %49 : vector<8x512xf32>
    %c0_32 = arith.constant 0 : index
    %c0_33 = arith.constant 0 : index
    %51 = vector.load %arg8[%c0_32, %c0_33] : memref<1x512xf32, #tpu.memory_space<vmem>>, vector<1x512xf32>
    %52 = vector.broadcast %51 : vector<1x512xf32> to vector<8x512xf32>
    %53 = arith.addf %50, %52 : vector<8x512xf32>
    %54 = arith.negf %53 : vector<8x512xf32>
    %55 = math.exp %54 : vector<8x512xf32>
    %cst_34 = arith.constant 1.000000e+00 : f32
    %56 = vector.broadcast %cst_34 : f32 to vector<8x512xf32>
    %57 = arith.addf %56, %55 : vector<8x512xf32>
    %58 = arith.divf %56, %57 : vector<8x512xf32>
    %59 = vector.extract_strided_slice %58 {offsets = [0, 0], sizes = [8, 128], strides = [1, 1]} : vector<8x512xf32> to vector<8x128xf32>
    %60 = vector.extract_strided_slice %58 {offsets = [0, 128], sizes = [8, 128], strides = [1, 1]} : vector<8x512xf32> to vector<8x128xf32>
    %61 = vector.extract_strided_slice %58 {offsets = [0, 256], sizes = [8, 128], strides = [1, 1]} : vector<8x512xf32> to vector<8x128xf32>
    %cst_35 = arith.constant 2.000000e+00 : f32
    %62 = vector.broadcast %cst_35 : f32 to vector<8x128xf32>
    %63 = arith.mulf %62, %61 : vector<8x128xf32>
    %cst_36 = arith.constant 1.000000e+00 : f32
    %64 = vector.broadcast %cst_36 : f32 to vector<8x128xf32>
    %65 = arith.subf %63, %64 : vector<8x128xf32>
    %66 = vector.extract_strided_slice %58 {offsets = [0, 384], sizes = [8, 128], strides = [1, 1]} : vector<8x512xf32> to vector<8x128xf32>
    %c1_37 = arith.constant 1 : index
    %c0_38 = arith.constant 0 : index
    %c0_39 = arith.constant 0 : index
    %67 = vector.load %arg13[%c1_37, %c0_38, %c0_39] : memref<2x8x128xf32, #tpu.memory_space<vmem>>, vector<1x8x128xf32>
    %68 = vector.shape_cast %67 : vector<1x8x128xf32> to vector<8x128xf32>
    %69 = arith.mulf %60, %68 : vector<8x128xf32>
    %70 = arith.mulf %59, %65 : vector<8x128xf32>
    %71 = arith.addf %69, %70 : vector<8x128xf32>
    %72 = math.tanh %71 : vector<8x128xf32>
    %73 = arith.mulf %66, %72 : vector<8x128xf32>
    %c1_40 = arith.constant 1 : index
    %c0_41 = arith.constant 0 : index
    %c0_42 = arith.constant 0 : index
    %74 = vector.load %arg13[%c1_40, %c0_41, %c0_42] : memref<2x8x128xf32, #tpu.memory_space<vmem>>, vector<1x8x128xf32>
    %75 = vector.shape_cast %74 : vector<1x8x128xf32> to vector<8x128xf32>
    %76 = vector.shape_cast %71 : vector<8x128xf32> to vector<1x8x128xf32>
    tpu.vector_store %arg13[%c1_40, %c0_41, %c0_42], %76 {strides = array<i32>} : memref<2x8x128xf32, #tpu.memory_space<vmem>>, vector<1x8x128xf32>,
    %c1_43 = arith.constant 1 : index
    %c0_44 = arith.constant 0 : index
    %c0_45 = arith.constant 0 : index
    %77 = vector.load %arg12[%c1_43, %c0_44, %c0_45] : memref<2x8x128xf32, #tpu.memory_space<vmem>>, vector<1x8x128xf32>
    %78 = vector.shape_cast %77 : vector<1x8x128xf32> to vector<8x128xf32>
    %79 = vector.shape_cast %73 : vector<8x128xf32> to vector<1x8x128xf32>
    tpu.vector_store %arg12[%c1_43, %c0_44, %c0_45], %79 {strides = array<i32>} : memref<2x8x128xf32, #tpu.memory_space<vmem>>, vector<1x8x128xf32>,
    %80 = arith.truncf %73 : vector<8x128xf32> to vector<8x128xbf16>
    %c0_46 = arith.constant 0 : index
    %c0_47 = arith.constant 0 : index
    %81 = vector.load %arg9[%c0_46, %c0_47] : memref<128x128xbf16, #tpu.memory_space<vmem>>, vector<128x128xbf16>
    %cst_48 = arith.constant dense<0.000000e+00> : vector<8x128xf32>
    %82 = tpu.matmul %80, %81, %cst_48 {dimension_numbers = #tpu.dot_dimension_numbers<[1], [0], [0], [1], [0, 0, 1, 1], [], []>} : vector<8x128xbf16>, vector<128x128xbf16>, vector<8x128xf32> -> vector<8x128xf32>
    %c0_49 = arith.constant 0 : index
    %c0_50 = arith.constant 0 : index
    %83 = vector.load %arg10[%c0_49, %c0_50] : memref<1x128xf32, #tpu.memory_space<vmem>>, vector<1x128xf32>
    %84 = vector.broadcast %83 : vector<1x128xf32> to vector<8x128xf32>
    %85 = arith.addf %82, %84 : vector<8x128xf32>
    %c0_51 = arith.constant 0 : index
    %c0_52 = arith.constant 0 : index
    %c0_53 = arith.constant 0 : index
    %86 = vector.load %arg11[%c0_51, %c0_52, %c0_53] : memref<1x8x128xf32, #tpu.memory_space<vmem>>, vector<1x8x128xf32>
    %87 = vector.shape_cast %86 : vector<1x8x128xf32> to vector<8x128xf32>
    %88 = vector.shape_cast %85 : vector<8x128xf32> to vector<1x8x128xf32>
    tpu.vector_store %arg11[%c0_51, %c0_52, %c0_53], %88 {strides = array<i32>} : memref<1x8x128xf32, #tpu.memory_space<vmem>>, vector<1x8x128xf32>,
    %c0_54 = arith.constant 0 : index
    %c0_55 = arith.constant 0 : index
    %89 = vector.load %arg14[%c0_54, %c0_55] : memref<8x128xf32, #tpu.memory_space<vmem>>, vector<8x128xf32>
    tpu.vector_store %arg14[%c0_54, %c0_55], %85 {strides = array<i32>} : memref<8x128xf32, #tpu.memory_space<vmem>>, vector<8x128xf32>,
    return
  }
  func.func @transform_0(%arg0: i32, %arg1: i32) -> (i32, i32) {
    %c0_i32 = arith.constant 0 : i32
    %c0_i32_0 = arith.constant 0 : i32
    return %arg0, %c0_i32 : i32, i32
  }
  func.func @transform_1(%arg0: i32, %arg1: i32) -> (i32, i32) {
    %c0_i32 = arith.constant 0 : i32
    %c0_i32_0 = arith.constant 0 : i32
    %c0_i32_1 = arith.constant 0 : i32
    return %c0_i32, %c0_i32_0 : i32, i32
  }
  func.func @transform_2(%arg0: i32, %arg1: i32) -> (i32, i32) {
    %c0_i32 = arith.constant 0 : i32
    %c0_i32_0 = arith.constant 0 : i32
    %c0_i32_1 = arith.constant 0 : i32
    return %c0_i32, %c0_i32_0 : i32, i32
  }
  func.func @transform_3(%arg0: i32, %arg1: i32) -> (i32, i32) {
    %c0_i32 = arith.constant 0 : i32
    %c0_i32_0 = arith.constant 0 : i32
    %c0_i32_1 = arith.constant 0 : i32
    return %c0_i32, %c0_i32_0 : i32, i32
  }
  func.func @transform_4(%arg0: i32, %arg1: i32) -> (i32, i32) {
    %c0_i32 = arith.constant 0 : i32
    %c0_i32_0 = arith.constant 0 : i32
    %c0_i32_1 = arith.constant 0 : i32
    return %c0_i32, %c0_i32_0 : i32, i32
  }
  func.func @transform_5(%arg0: i32, %arg1: i32) -> (i32, i32) {
    %c0_i32 = arith.constant 0 : i32
    %c0_i32_0 = arith.constant 0 : i32
    %c0_i32_1 = arith.constant 0 : i32
    return %c0_i32, %c0_i32_0 : i32, i32
  }
  func.func @transform_6(%arg0: i32, %arg1: i32) -> (i32, i32) {
    %c0_i32 = arith.constant 0 : i32
    %c0_i32_0 = arith.constant 0 : i32
    %c0_i32_1 = arith.constant 0 : i32
    return %c0_i32, %c0_i32_0 : i32, i32
  }
  func.func @transform_7(%arg0: i32, %arg1: i32) -> (i32, i32) {
    %c0_i32 = arith.constant 0 : i32
    %c0_i32_0 = arith.constant 0 : i32
    %c0_i32_1 = arith.constant 0 : i32
    return %c0_i32, %c0_i32_0 : i32, i32
  }
  func.func @transform_8(%arg0: i32, %arg1: i32) -> (i32, i32) {
    %c0_i32 = arith.constant 0 : i32
    %c0_i32_0 = arith.constant 0 : i32
    %c0_i32_1 = arith.constant 0 : i32
    return %c0_i32, %c0_i32_0 : i32, i32
  }
  func.func @transform_9(%arg0: i32, %arg1: i32) -> (i32, i32, i32) {
    %c0_i32 = arith.constant 0 : i32
    %c0_i32_0 = arith.constant 0 : i32
    return %arg1, %arg0, %c0_i32 : i32, i32, i32
  }
}

</mosaic_0001>

<llo_original>
// kernel: lstm_forward.1
$region0: #{lstm_forward.1}
  #allocation0 [shape = 'u32[]', space=smem, size = 0x4, offset = 0x4, fixed_abs, tag = 'smem constant byte address 0x4 - core index']
  #allocation1 [shape = 'u32[144,128]{1,0:T(1,128)}', space=vmem, size = 0x12000, scoped, tag = 'internal scratch']
  #allocation2 [shape = 'f32[2,8,128]{2,1,0:T(8,128)}', space=vmem, size = 0x2000, scoped, tag = 'scratch operand']
  #allocation3 [shape = 'f32[2,8,128]{2,1,0:T(8,128)}', space=vmem, size = 0x2000, scoped, tag = 'scratch operand']
  #allocation4 [shape = 'f32[8,128]{1,0:T(8,128)}', space=vmem, size = 0x1000, scoped, tag = 'scratch operand']
  %s0 = inlined_call_operand.vmem [shape: f32[8,128], index: 0, kind: input, shape index: {}]
  %s1 = inlined_call_operand.hbm [shape: bf16[128,512], index: 1, kind: input, shape index: {}]
  %s2 = inlined_call_operand.hbm [shape: bf16[128,512], index: 2, kind: input, shape index: {}]
  %s3 = inlined_call_operand.hbm [shape: bf16[128,512], index: 3, kind: input, shape index: {}]
  %s4 = inlined_call_operand.hbm [shape: bf16[128,512], index: 4, kind: input, shape index: {}]
  %s5 = inlined_call_operand.vmem [shape: f32[1,512], index: 5, kind: input, shape index: {}]
  %s6 = inlined_call_operand.vmem [shape: f32[1,512], index: 6, kind: input, shape index: {}]
  %s7 = inlined_call_operand.hbm [shape: bf16[128,128], index: 7, kind: input, shape index: {}]
  %s8 = inlined_call_operand.vmem [shape: f32[1,128], index: 8, kind: input, shape index: {}]
  %s9 = inlined_call_operand.vmem [shape: f32[2,8,128], index: 9, kind: output, shape index: {}]
  %s10 = sld [smem:[#allocation0]]
  $region93: #{lstm_forward.1} parent=0
    _
  %s12 = ssub.s32 1, %s10
  %s13 = scalar_select 0, %s12, %s10
  $region1: #{lstm_forward.1} parent=0
    #allocation5 [shape = 'u8[131072]{0}', space=vmem, size = 0x20000, scoped, tag = 'input window, operand 1, single buffered']
    #allocation6 [shape = 's32[2]{0}', space=sflag, size = 0x8, scoped, tag = 'scoped memory for lstm_forward.1']
    #allocation7 [shape = 'u8[131072]{0}', space=vmem, size = 0x20000, scoped, tag = 'input window, operand 2, single buffered']
    #allocation8 [shape = 's32[1]{0}', space=sflag, size = 0x4, scoped, tag = 'scoped memory for lstm_forward.1']
    #allocation9 [shape = 'u8[131072]{0}', space=vmem, size = 0x20000, scoped, tag = 'input window, operand 3, single buffered']
    #allocation10 [shape = 'u8[131072]{0}', space=vmem, size = 0x20000, scoped, tag = 'input window, operand 4, single buffered']
    #allocation11 [shape = 's32[1]{0}', space=sflag, size = 0x4, scoped, tag = 'scoped memory for lstm_forward.1']
    #allocation12 [shape = 'u8[32768]{0}', space=vmem, size = 0x8000, scoped, tag = 'input window, operand 7, single buffered']
    %14 = vsyncpa [#allocation6], 0
    %15 = vsyncpa [#allocation8], 0
    %16 = vsyncpa [#allocation11], 0
    loop: start=0, step=1, limit=4
    $region2: #{lstm_forward.1} parent=1 // loop_pre_header
      _
    $region3: #{lstm_forward.1} parent=1 // loop_header
      %s18 = sphi 0, %s22
      %p19 = scmp.ge.s32.totalorder %s18, 4
      %s25 = sphi 0, %s37
      %s26 = sphi 0, %s33
      %s27 = sphi 0, %s25
      %s28 = sphi 0, %s26
      %s29 = sphi 0, %s27
      %s30 = sphi 0, %s28
      %s40 = sphi 0, %s42
      %s43 = sphi 0, %s40
      %s44 = sphi 0, %s43
      %s60 = sphi 0, %s44
      %s64 = sphi 0, %s64
      %s66 = sphi 0, %s64
      %s67 = sphi 0, %s66
      %s81 = sphi 0, %s67
      %s85 = sphi 0, %s85
      %s87 = sphi 0, %s85
      %s88 = sphi 0, %s87
      %s102 = sphi 0, %s88
      %s106 = sphi 0, %s106
      %s108 = sphi 0, %s106
      %s109 = sphi 0, %s108
      %s123 = sphi 0, %s109
      %s127 = sphi 0, %s127
      %s129 = sphi 0, %s127
      %s130 = sphi 0, %s129
      %s144 = sphi 0, %s130
      %s148 = sphi 0, %s148
      %s150 = sphi 0, %s148
      %s151 = sphi 0, %s150
      %s165 = sphi 0, %s151
      %s169 = sphi 0, %s169
      %s171 = sphi 0, %s169
      %s172 = sphi 0, %s171
      %s186 = sphi 0, %s172
      %s190 = sphi 0, %s190
      %s192 = sphi 0, %s190
      %s193 = sphi 0, %s192
      %s207 = sphi 0, %s193
      %s211 = sphi 0, %s211
      %s213 = sphi 0, %s211
      %s214 = sphi 0, %s213
      %s228 = sphi 0, %s214
      %s236 = sphi 0, %s238
      %s239 = sphi 0, %s236
      %s240 = sphi 0, %s239
      %s256 = sphi 0, %s240
    $region4: #{lstm_forward.1} parent=1 // loop_header_branch
      %21 = sbr.rel (%p19) target = $region8
    $region5: #{lstm_forward.1} parent=1 // loop_body
      %s23 = ssub.s32 %s18, 1
      %s24 = ssub.s32 %s18, 2
      %s31 = sadd.s32 1, %s26
      %p32 = scmp.ge.s32.totalorder %s31, 2
      %s33 = scalar_select %p32, 0, %s31
      %s34 = sadd.s32 1, %s25
      %s35 = scalar_select %p32, %s34, %s25
      %p36 = scmp.ge.s32.totalorder %s35, 1
      %s37 = scalar_select %p36, 0, %s35
      %s38 = ssub.s32 %s25, %s37
      %p39 = scmp.eq.s32.totalorder %s38, 0
      %s41 = sadd.s32 %s40, 1
      %s42 = scalar_select %p39, %s40, %s41
      %p45 = pneg %p39
      %p46 = scmp.eq.s32.totalorder %s18, 1
      %p47 = por %p45, %p46
      %p48 = scmp.ne.s32.totalorder %s40, %s43
      %p49 = scmp.eq.s32.totalorder %s18, 0
      %p50 = por %p48, %p49
      %p51 = scmp.ne.s32.totalorder %s40, %s43
      %p52 = scmp.eq.s32.totalorder %s23, 1
      %p53 = por %p51, %p52
      %p54 = scmp.ne.s32.totalorder %s43, %s44
      %p55 = scmp.eq.s32.totalorder %s23, 0
      %p56 = por %p54, %p55
      %p57 = scmp.ne.s32.totalorder %s43, %s44
      %p58 = scmp.eq.s32.totalorder %s24, 1
      %p59 = por %p57, %p58
      %p61 = scmp.ne.s32.totalorder %s44, %s60
      %p62 = scmp.eq.s32.totalorder %s24, 0
      %p63 = por %p61, %p62
      %s65 = sadd.s32 %s64, 1
      %p68 = scmp.eq.s32.totalorder %s18, 1
      %p69 = scmp.ne.s32.totalorder %s64, %s66
      %p70 = scmp.eq.s32.totalorder %s18, 0
      %p71 = por %p69, %p70
      %p72 = scmp.ne.s32.totalorder %s64, %s66
      %p73 = scmp.eq.s32.totalorder %s23, 1
      %p74 = por %p72, %p73
      %p75 = scmp.ne.s32.totalorder %s66, %s67
      %p76 = scmp.eq.s32.totalorder %s23, 0
      %p77 = por %p75, %p76
      %p78 = scmp.ne.s32.totalorder %s66, %s67
      %p79 = scmp.eq.s32.totalorder %s24, 1
      %p80 = por %p78, %p79
      %p82 = scmp.ne.s32.totalorder %s67, %s81
      %p83 = scmp.eq.s32.totalorder %s24, 0
      %p84 = por %p82, %p83
      %s86 = sadd.s32 %s85, 1
      %p89 = scmp.eq.s32.totalorder %s18, 1
      %p90 = scmp.ne.s32.totalorder %s85, %s87
      %p91 = scmp.eq.s32.totalorder %s18, 0
      %p92 = por %p90, %p91
      %p93 = scmp.ne.s32.totalorder %s85, %s87
      %p94 = scmp.eq.s32.totalorder %s23, 1
      %p95 = por %p93, %p94
      %p96 = scmp.ne.s32.totalorder %s87, %s88
      %p97 = scmp.eq.s32.totalorder %s23, 0
      %p98 = por %p96, %p97
      %p99 = scmp.ne.s32.totalorder %s87, %s88
      %p100 = scmp.eq.s32.totalorder %s24, 1
      %p101 = por %p99, %p100
      %p103 = scmp.ne.s32.totalorder %s88, %s102
      %p104 = scmp.eq.s32.totalorder %s24, 0
      %p105 = por %p103, %p104
      %s107 = sadd.s32 %s106, 1
      %p110 = scmp.eq.s32.totalorder %s18, 1
      %p111 = scmp.ne.s32.totalorder %s106, %s108
      %p112 = scmp.eq.s32.totalorder %s18, 0
      %p113 = por %p111, %p112
      %p114 = scmp.ne.s32.totalorder %s106, %s108
      %p115 = scmp.eq.s32.totalorder %s23, 1
      %p116 = por %p114, %p115
      %p117 = scmp.ne.s32.totalorder %s108, %s109
      %p118 = scmp.eq.s32.totalorder %s23, 0
      %p119 = por %p117, %p118
      %p120 = scmp.ne.s32.totalorder %s108, %s109
      %p121 = scmp.eq.s32.totalorder %s24, 1
      %p122 = por %p120, %p121
      %p124 = scmp.ne.s32.totalorder %s109, %s123
      %p125 = scmp.eq.s32.totalorder %s24, 0
      %p126 = por %p124, %p125
      %s128 = sadd.s32 %s127, 1
      %p131 = scmp.eq.s32.totalorder %s18, 1
      %p132 = scmp.ne.s32.totalorder %s127, %s129
      %p133 = scmp.eq.s32.totalorder %s18, 0
      %p134 = por %p132, %p133
      %p135 = scmp.ne.s32.totalorder %s127, %s129
      %p136 = scmp.eq.s32.totalorder %s23, 1
      %p137 = por %p135, %p136
      %p138 = scmp.ne.s32.totalorder %s129, %s130
      %p139 = scmp.eq.s32.totalorder %s23, 0
      %p140 = por %p138, %p139
      %p141 = scmp.ne.s32.totalorder %s129, %s130
      %p142 = scmp.eq.s32.totalorder %s24, 1
      %p143 = por %p141, %p142
      %p145 = scmp.ne.s32.totalorder %s130, %s144
      %p146 = scmp.eq.s32.totalorder %s24, 0
      %p147 = por %p145, %p146
      %s149 = sadd.s32 %s148, 1
      %p152 = scmp.eq.s32.totalorder %s18, 1
      %p153 = scmp.ne.s32.totalorder %s148, %s150
      %p154 = scmp.eq.s32.totalorder %s18, 0
      %p155 = por %p153, %p154
      %p156 = scmp.ne.s32.totalorder %s148, %s150
      %p157 = scmp.eq.s32.totalorder %s23, 1
      %p158 = por %p156, %p157
      %p159 = scmp.ne.s32.totalorder %s150, %s151
      %p160 = scmp.eq.s32.totalorder %s23, 0
      %p161 = por %p159, %p160
      %p162 = scmp.ne.s32.totalorder %s150, %s151
      %p163 = scmp.eq.s32.totalorder %s24, 1
      %p164 = por %p162, %p163
      %p166 = scmp.ne.s32.totalorder %s151, %s165
      %p167 = scmp.eq.s32.totalorder %s24, 0
      %p168 = por %p166, %p167
      %s170 = sadd.s32 %s169, 1
      %p173 = scmp.eq.s32.totalorder %s18, 1
      %p174 = scmp.ne.s32.totalorder %s169, %s171
      %p175 = scmp.eq.s32.totalorder %s18, 0
      %p176 = por %p174, %p175
      %p177 = scmp.ne.s32.totalorder %s169, %s171
      %p178 = scmp.eq.s32.totalorder %s23, 1
      %p179 = por %p177, %p178
      %p180 = scmp.ne.s32.totalorder %s171, %s172
      %p181 = scmp.eq.s32.totalorder %s23, 0
      %p182 = por %p180, %p181
      %p183 = scmp.ne.s32.totalorder %s171, %s172
      %p184 = scmp.eq.s32.totalorder %s24, 1
      %p185 = por %p183, %p184
      %p187 = scmp.ne.s32.totalorder %s172, %s186
      %p188 = scmp.eq.s32.totalorder %s24, 0
      %p189 = por %p187, %p188
      %s191 = sadd.s32 %s190, 1
      %p194 = scmp.eq.s32.totalorder %s18, 1
      %p195 = scmp.ne.s32.totalorder %s190, %s192
      %p196 = scmp.eq.s32.totalorder %s18, 0
      %p197 = por %p195, %p196
      %p198 = scmp.ne.s32.totalorder %s190, %s192
      %p199 = scmp.eq.s32.totalorder %s23, 1
      %p200 = por %p198, %p199
      %p201 = scmp.ne.s32.totalorder %s192, %s193
      %p202 = scmp.eq.s32.totalorder %s23, 0
      %p203 = por %p201, %p202
      %p204 = scmp.ne.s32.totalorder %s192, %s193
      %p205 = scmp.eq.s32.totalorder %s24, 1
      %p206 = por %p204, %p205
      %p208 = scmp.ne.s32.totalorder %s193, %s207
      %p209 = scmp.eq.s32.totalorder %s24, 0
      %p210 = por %p208, %p209
      %s212 = sadd.s32 %s211, 1
      %p215 = scmp.eq.s32.totalorder %s18, 1
      %p216 = scmp.ne.s32.totalorder %s211, %s213
      %p217 = scmp.eq.s32.totalorder %s18, 0
      %p218 = por %p216, %p217
      %p219 = scmp.ne.s32.totalorder %s211, %s213
      %p220 = scmp.eq.s32.totalorder %s23, 1
      %p221 = por %p219, %p220
      %p222 = scmp.ne.s32.totalorder %s213, %s214
      %p223 = scmp.eq.s32.totalorder %s23, 0
      %p224 = por %p222, %p223
      %p225 = scmp.ne.s32.totalorder %s213, %s214
      %p226 = scmp.eq.s32.totalorder %s24, 1
      %p227 = por %p225, %p226
      %p229 = scmp.ne.s32.totalorder %s214, %s228
      %p230 = scmp.eq.s32.totalorder %s24, 0
      %p231 = por %p229, %p230
      %s232 = ssub.s32 %s26, %s33
      %s233 = ssub.s32 %s25, %s37
      %s234 = sor.u32 %s232, %s233
      %p235 = scmp.eq.s32.totalorder %s234, 0
      %s237 = sadd.s32 %s236, 1
      %s238 = scalar_select %p235, %s236, %s237
      %p241 = pneg %p235
      %p242 = scmp.eq.s32.totalorder %s18, 1
      %p243 = por %p241, %p242
      %p244 = scmp.ne.s32.totalorder %s236, %s239
      %p245 = scmp.eq.s32.totalorder %s18, 0
      %p246 = por %p244, %p245
      %p247 = scmp.ne.s32.totalorder %s236, %s239
      %p248 = scmp.eq.s32.totalorder %s23, 1
      %p249 = por %p247, %p248
      %p250 = scmp.ne.s32.totalorder %s239, %s240
      %p251 = scmp.eq.s32.totalorder %s23, 0
      %p252 = por %p250, %p251
      %p253 = scmp.ne.s32.totalorder %s239, %s240
      %p254 = scmp.eq.s32.totalorder %s24, 1
      %p255 = por %p253, %p254
      %p257 = scmp.ne.s32.totalorder %s240, %s256
      %p258 = scmp.eq.s32.totalorder %s24, 0
      %p259 = por %p257, %p258
      %p260 = scmp.le.s32.totalorder 1, %s18
      %p261 = scmp.lt.s32.totalorder %s18, 3
      %p262 = pnand %p260, %p261
      %p263 = pneg %p262
      // Predicated region
      $region9: #{lstm_forward.1} parent=5 // pred_check
        _
      $region10: #{lstm_forward.1} parent=5 // pred_check_branch
        %265 = sbr.rel (%p262) target = $region12
      $region11: #{lstm_forward.1} parent=5 // pred_region
        %s266 = ssub.s32 %s18, 1
        // Predicated region
        $region13: #{lstm_forward.1} parent=11 // pred_check
          %p267 = pneg %p56
        $region14: #{lstm_forward.1} parent=11 // pred_check_branch
          %269 = sbr.rel (%p267) target = $region16
        $region15: #{lstm_forward.1} parent=11 // pred_region
          %p270 = scmp.lt.s32.totalorder %s27, 0
          %s271 = scalar_select %p270, %s27, 0
          %s272 = smul.addr %s271, 8
          %s273 = scalar_lea.vmem %s0, %s272
        $region16: #{lstm_forward.1} parent=11 // pred_fallthru
          _
        // Predicated region
        $region17: #{lstm_forward.1} parent=11 // pred_check
          %p274 = pneg %p77
        $region18: #{lstm_forward.1} parent=11 // pred_check_branch
          %276 = sbr.rel (%p274) target = $region20
        $region19: #{lstm_forward.1} parent=11 // pred_region
          %s278 = ssub.s32 4096, 4096
          %279 = vsyncadd [#allocation6], %s278
          %s280 = sshll.u32 [#allocation5], 4
          %s281 = int_to_ptr.vmem [resolvable:$true] %s280
          %286 = dma.hbm_to_vmem [thread:$0]  %s1, 4096, %s281, [#allocation6], 256, 256, 16
        $region20: #{lstm_forward.1} parent=11 // pred_fallthru
          _
        // Predicated region
        $region21: #{lstm_forward.1} parent=11 // pred_check
          %p287 = pneg %p98
        $region22: #{lstm_forward.1} parent=11 // pred_check_branch
          %289 = sbr.rel (%p287) target = $region24
        $region23: #{lstm_forward.1} parent=11 // pred_region
          %s291 = ssub.s32 4096, 4096
          %292 = vsyncadd [#allocation8], %s291
          %s293 = sshll.u32 [#allocation7], 4
          %s294 = int_to_ptr.vmem [resolvable:$true] %s293
          %299 = dma.hbm_to_vmem [thread:$0]  %s2, 4096, %s294, [#allocation8], 256, 256, 16
        $region24: #{lstm_forward.1} parent=11 // pred_fallthru
          _
        // Predicated region
        $region25: #{lstm_forward.1} parent=11 // pred_check
          %p300 = pneg %p119
        $region26: #{lstm_forward.1} parent=11 // pred_check_branch
          %302 = sbr.rel (%p300) target = $region28
        $region27: #{lstm_forward.1} parent=11 // pred_region
          %s304 = ssub.s32 4096, 4096
          %305 = vsyncadd [#allocation8], %s304
          %s306 = sshll.u32 [#allocation9], 4
          %s307 = int_to_ptr.vmem [resolvable:$true] %s306
          %312 = dma.hbm_to_vmem [thread:$0]  %s3, 4096, %s307, [#allocation8], 256, 256, 16
        $region28: #{lstm_forward.1} parent=11 // pred_fallthru
          _
        // Predicated region
        $region29: #{lstm_forward.1} parent=11 // pred_check
          %p313 = pneg %p140
        $region30: #{lstm_forward.1} parent=11 // pred_check_branch
          %315 = sbr.rel (%p313) target = $region32
        $region31: #{lstm_forward.1} parent=11 // pred_region
          %s317 = ssub.s32 4096, 4096
          %318 = vsyncadd [#allocation11], %s317
          %s319 = sshll.u32 [#allocation10], 4
          %s320 = int_to_ptr.vmem [resolvable:$true] %s319
          %325 = dma.hbm_to_vmem [thread:$0]  %s4, 4096, %s320, [#allocation11], 256, 256, 16
        $region32: #{lstm_forward.1} parent=11 // pred_fallthru
          _
        // Predicated region
        $region33: #{lstm_forward.1} parent=11 // pred_check
          %p326 = pneg %p161
        $region34: #{lstm_forward.1} parent=11 // pred_check_branch
          %328 = sbr.rel (%p326) target = $region36
        $region35: #{lstm_forward.1} parent=11 // pred_region
          _
        $region36: #{lstm_forward.1} parent=11 // pred_fallthru
          _
        // Predicated region
        $region37: #{lstm_forward.1} parent=11 // pred_check
          %p329 = pneg %p182
        $region38: #{lstm_forward.1} parent=11 // pred_check_branch
          %331 = sbr.rel (%p329) target = $region40
        $region39: #{lstm_forward.1} parent=11 // pred_region
          _
        $region40: #{lstm_forward.1} parent=11 // pred_fallthru
          _
        // Predicated region
        $region41: #{lstm_forward.1} parent=11 // pred_check
          %p332 = pneg %p203
        $region42: #{lstm_forward.1} parent=11 // pred_check_branch
          %334 = sbr.rel (%p332) target = $region44
        $region43: #{lstm_forward.1} parent=11 // pred_region
          %s336 = ssub.s32 1024, 1024
          %337 = vsyncadd [#allocation11], %s336
          %s338 = sshll.u32 [#allocation12], 4
          %s339 = int_to_ptr.vmem [resolvable:$true] %s338
          %344 = dma.hbm_to_vmem [thread:$0]  %s7, 1024, %s339, [#allocation11], 64, 64, 4
        $region44: #{lstm_forward.1} parent=11 // pred_fallthru
          _
        // Predicated region
        $region45: #{lstm_forward.1} parent=11 // pred_check
          %p345 = pneg %p224
        $region46: #{lstm_forward.1} parent=11 // pred_check_branch
          %347 = sbr.rel (%p345) target = $region48
        $region47: #{lstm_forward.1} parent=11 // pred_region
          _
        $region48: #{lstm_forward.1} parent=11 // pred_fallthru
          _
      $region12: #{lstm_forward.1} parent=5 // pred_fallthru
        _
      %p348 = scmp.lt.s32.totalorder %s18, 2
      // Predicated region
      $region49: #{lstm_forward.1} parent=5 // pred_check
        %p349 = pneg %p348
      $region50: #{lstm_forward.1} parent=5 // pred_check_branch
        %351 = sbr.rel (%p349) target = $region52
      $region51: #{lstm_forward.1} parent=5 // pred_region
        _
      $region52: #{lstm_forward.1} parent=5 // pred_fallthru
        _
      %p352 = scmp.le.s32.totalorder 1, %s18
      %p353 = scmp.lt.s32.totalorder %s18, 3
      %p354 = pnand %p352, %p353
      %p355 = pneg %p354
      // Predicated region
      $region53: #{lstm_forward.1} parent=5 // pred_check
        _
      $region54: #{lstm_forward.1} parent=5 // pred_check_branch
        %357 = sbr.rel (%p354) target = $region56
      $region55: #{lstm_forward.1} parent=5 // pred_region
        %s358 = ssub.s32 %s18, 1
        // Predicated region
        $region57: #{lstm_forward.1} parent=55 // pred_check
          %p359 = pneg %p77
        $region58: #{lstm_forward.1} parent=55 // pred_check_branch
          %361 = sbr.rel (%p359) target = $region60
        $region59: #{lstm_forward.1} parent=55 // pred_region
          %362 = dma.done [#allocation6], 4096
        $region60: #{lstm_forward.1} parent=55 // pred_fallthru
          _
        // Predicated region
        $region61: #{lstm_forward.1} parent=55 // pred_check
          %p363 = pneg %p98
        $region62: #{lstm_forward.1} parent=55 // pred_check_branch
          %365 = sbr.rel (%p363) target = $region64
        $region63: #{lstm_forward.1} parent=55 // pred_region
          %366 = dma.done [#allocation8], 4096
        $region64: #{lstm_forward.1} parent=55 // pred_fallthru
          _
        // Predicated region
        $region65: #{lstm_forward.1} parent=55 // pred_check
          %p367 = pneg %p119
        $region66: #{lstm_forward.1} parent=55 // pred_check_branch
          %369 = sbr.rel (%p367) target = $region68
        $region67: #{lstm_forward.1} parent=55 // pred_region
          %370 = dma.done [#allocation8], 4096
        $region68: #{lstm_forward.1} parent=55 // pred_fallthru
          _
        // Predicated region
        $region69: #{lstm_forward.1} parent=55 // pred_check
          %p371 = pneg %p140
        $region70: #{lstm_forward.1} parent=55 // pred_check_branch
          %373 = sbr.rel (%p371) target = $region72
        $region71: #{lstm_forward.1} parent=55 // pred_region
          %374 = dma.done [#allocation11], 4096
        $region72: #{lstm_forward.1} parent=55 // pred_fallthru
          _
        // Predicated region
        $region73: #{lstm_forward.1} parent=55 // pred_check
          %p375 = pneg %p203
        $region74: #{lstm_forward.1} parent=55 // pred_check_branch
          %377 = sbr.rel (%p375) target = $region76
        $region75: #{lstm_forward.1} parent=55 // pred_region
          %378 = dma.done [#allocation11], 1024
        $region76: #{lstm_forward.1} parent=55 // pred_fallthru
          _
        %p379 = scmp.lt.s32.totalorder %s27, 0
        %s380 = scalar_select %p379, %s27, 0
        %s381 = smul.addr %s380, 8
        %s382 = scalar_lea.vmem %s0, %s381
        %p383 = pneg %p56
        %p384 = pneg %p53
        %p385 = pneg %p77
        %p386 = pneg %p74
        %p387 = pneg %p98
        %p388 = pneg %p95
        %p389 = pneg %p119
        %p390 = pneg %p116
        %p391 = pneg %p140
        %p392 = pneg %p137
        %p393 = pneg %p161
        %p394 = pneg %p158
        %p395 = pneg %p182
        %p396 = pneg %p179
        %p397 = pneg %p203
        %p398 = pneg %p200
        %p399 = pneg %p224
        %p400 = pneg %p221
        %p401 = pneg %p252
        %p402 = pneg %p249
        %p403 = scmp.lt.s32.totalorder %s28, 1
        %s404 = scalar_select %p403, %s28, 1
        %p405 = scmp.lt.s32.totalorder %s27, 0
        %s406 = scalar_select %p405, %s27, 0
        %s407 = sadd.s32 %s406, %s404
        %s408 = smul.addr %s407, 8
        %s409 = scalar_lea.vmem %s9, %s408
        %p410 = scmp.lt.s32.totalorder %s27, 0
        %s411 = scalar_select %p410, %s27, 0
        %s412 = smul.addr %s411, 8
        %s413 = scalar_lea.vmem %s0, %s412
        %p414 = scmp.lt.s32.totalorder %s28, 1
        %s415 = scalar_select %p414, %s28, 1
        %p416 = scmp.lt.s32.totalorder %s27, 0
        %s417 = scalar_select %p416, %s27, 0
        %s418 = sadd.s32 %s417, %s415
        %s419 = smul.addr %s418, 8
        %s420 = scalar_lea.vmem %s9, %s419
        %p422 = scmp.eq.s32.totalorder %s28, 0
        // Predicated region
        $region77: #{lstm_forward.1} parent=55 // pred_check
          %p423 = pneg %p422
        $region78: #{lstm_forward.1} parent=55 // pred_check_branch
          %425 = sbr.rel (%p423) target = $region80
        $region79: #{lstm_forward.1} parent=55 // pred_region
          %426 = vst [vmem:[#allocation2] sm:$0xff] 0.0
          %427 = vst [vmem:[#allocation2 + $0x8] sm:$0xff] 0.0
          %428 = vst [vmem:[#allocation3] sm:$0xff] 0.0
          %429 = vst [vmem:[#allocation3 + $0x8] sm:$0xff] 0.0
          %v430 = vld [vmem:[%s413] sm:$0xff]
          %431 = vst [vmem:[#allocation4] sm:$0xff] %v430
        $region80: #{lstm_forward.1} parent=55 // pred_fallthru
          _
        %v432 = vld [vmem:[#allocation4] sm:$0xff]
        %v433 = vpack.c.bf16 %v432, %v432
        %v434 = vld [vmem:[#allocation5] sm:$0xff]
        %v435 = vld [vmem:[#allocation5 + $0x8] sm:$0xff]
        %v436 = vld [vmem:[#allocation5 + $0x10] sm:$0xff]
        %v437 = vld [vmem:[#allocation5 + $0x18] sm:$0xff]
        %v438 = vld [vmem:[#allocation5 + $0x20] sm:$0xff]
        %v439 = vld [vmem:[#allocation5 + $0x28] sm:$0xff]
        %v440 = vld [vmem:[#allocation5 + $0x30] sm:$0xff]
        %v441 = vld [vmem:[#allocation5 + $0x38] sm:$0xff]
        %v442 = vld [vmem:[#allocation5 + $0x40] sm:$0xff]
        %v443 = vld [vmem:[#allocation5 + $0x48] sm:$0xff]
        %v444 = vld [vmem:[#allocation5 + $0x50] sm:$0xff]
        %v445 = vld [vmem:[#allocation5 + $0x58] sm:$0xff]
        %v446 = vld [vmem:[#allocation5 + $0x60] sm:$0xff]
        %v447 = vld [vmem:[#allocation5 + $0x68] sm:$0xff]
        %v448 = vld [vmem:[#allocation5 + $0x70] sm:$0xff]
        %v449 = vld [vmem:[#allocation5 + $0x78] sm:$0xff]
        %v450 = vld [vmem:[#allocation5 + $0x80] sm:$0xff]
        %v451 = vld [vmem:[#allocation5 + $0x88] sm:$0xff]
        %v452 = vld [vmem:[#allocation5 + $0x90] sm:$0xff]
        %v453 = vld [vmem:[#allocation5 + $0x98] sm:$0xff]
        %v454 = vld [vmem:[#allocation5 + $0xa0] sm:$0xff]
        %v455 = vld [vmem:[#allocation5 + $0xa8] sm:$0xff]
        %v456 = vld [vmem:[#allocation5 + $0xb0] sm:$0xff]
        %v457 = vld [vmem:[#allocation5 + $0xb8] sm:$0xff]
        %v458 = vld [vmem:[#allocation5 + $0xc0] sm:$0xff]
        %v459 = vld [vmem:[#allocation5 + $0xc8] sm:$0xff]
        %v460 = vld [vmem:[#allocation5 + $0xd0] sm:$0xff]
        %v461 = vld [vmem:[#allocation5 + $0xd8] sm:$0xff]
        %v462 = vld [vmem:[#allocation5 + $0xe0] sm:$0xff]
        %v463 = vld [vmem:[#allocation5 + $0xe8] sm:$0xff]
        %v464 = vld [vmem:[#allocation5 + $0xf0] sm:$0xff]
        %v465 = vld [vmem:[#allocation5 + $0xf8] sm:$0xff]
        %v466 = vld [vmem:[#allocation2] sm:$0xff]
        %v467 = vpack.c.bf16 %v466, %v466
        %v468 = vld [vmem:[#allocation9] sm:$0xff]
        %v469 = vld [vmem:[#allocation9 + $0x8] sm:$0xff]
        %v470 = vld [vmem:[#allocation9 + $0x10] sm:$0xff]
        %v471 = vld [vmem:[#allocation9 + $0x18] sm:$0xff]
        %v472 = vld [vmem:[#allocation9 + $0x20] sm:$0xff]
        %v473 = vld [vmem:[#allocation9 + $0x28] sm:$0xff]
        %v474 = vld [vmem:[#allocation9 + $0x30] sm:$0xff]
        %v475 = vld [vmem:[#allocation9 + $0x38] sm:$0xff]
        %v476 = vld [vmem:[#allocation9 + $0x40] sm:$0xff]
        %v477 = vld [vmem:[#allocation9 + $0x48] sm:$0xff]
        %v478 = vld [vmem:[#allocation9 + $0x50] sm:$0xff]
        %v479 = vld [vmem:[#allocation9 + $0x58] sm:$0xff]
        %v480 = vld [vmem:[#allocation9 + $0x60] sm:$0xff]
        %v481 = vld [vmem:[#allocation9 + $0x68] sm:$0xff]
        %v482 = vld [vmem:[#allocation9 + $0x70] sm:$0xff]
        %v483 = vld [vmem:[#allocation9 + $0x78] sm:$0xff]
        %v484 = vld [vmem:[#allocation9 + $0x80] sm:$0xff]
        %v485 = vld [vmem:[#allocation9 + $0x88] sm:$0xff]
        %v486 = vld [vmem:[#allocation9 + $0x90] sm:$0xff]
        %v487 = vld [vmem:[#allocation9 + $0x98] sm:$0xff]
        %v488 = vld [vmem:[#allocation9 + $0xa0] sm:$0xff]
        %v489 = vld [vmem:[#allocation9 + $0xa8] sm:$0xff]
        %v490 = vld [vmem:[#allocation9 + $0xb0] sm:$0xff]
        %v491 = vld [vmem:[#allocation9 + $0xb8] sm:$0xff]
        %v492 = vld [vmem:[#allocation9 + $0xc0] sm:$0xff]
        %v493 = vld [vmem:[#allocation9 + $0xc8] sm:$0xff]
        %v494 = vld [vmem:[#allocation9 + $0xd0] sm:$0xff]
        %v495 = vld [vmem:[#allocation9 + $0xd8] sm:$0xff]
        %v496 = vld [vmem:[#allocation9 + $0xe0] sm:$0xff]
        %v497 = vld [vmem:[#allocation9 + $0xe8] sm:$0xff]
        %v498 = vld [vmem:[#allocation9 + $0xf0] sm:$0xff]
        %v499 = vld [vmem:[#allocation9 + $0xf8] sm:$0xff]
        %v532 = vunpack.c.l.b16 %v468
        %v533 = vunpack.c.h.b16 %v468
        %v534 = vunpack.c.l.b16 %v469
        %v535 = vunpack.c.h.b16 %v469
        %v536 = vunpack.c.l.b16 %v470
        %v537 = vunpack.c.h.b16 %v470
        %v538 = vunpack.c.l.b16 %v471
        %v539 = vunpack.c.h.b16 %v471
        %v540 = vunpack.c.l.b16 %v472
        %v541 = vunpack.c.h.b16 %v472
        %v542 = vunpack.c.l.b16 %v473
        %v543 = vunpack.c.h.b16 %v473
        %v544 = vunpack.c.l.b16 %v474
        %v545 = vunpack.c.h.b16 %v474
        %v546 = vunpack.c.l.b16 %v475
        %v547 = vunpack.c.h.b16 %v475
        %v548 = vunpack.c.l.b16 %v476
        %v549 = vunpack.c.h.b16 %v476
        %v550 = vunpack.c.l.b16 %v477
        %v551 = vunpack.c.h.b16 %v477
        %v552 = vunpack.c.l.b16 %v478
        %v553 = vunpack.c.h.b16 %v478
        %v554 = vunpack.c.l.b16 %v479
        %v555 = vunpack.c.h.b16 %v479
        %v556 = vunpack.c.l.b16 %v480
        %v557 = vunpack.c.h.b16 %v480
        %v558 = vunpack.c.l.b16 %v481
        %v559 = vunpack.c.h.b16 %v481
        %v560 = vunpack.c.l.b16 %v482
        %v561 = vunpack.c.h.b16 %v482
        %v562 = vunpack.c.l.b16 %v483
        %v563 = vunpack.c.h.b16 %v483
        %v564 = vunpack.c.l.b16 %v484
        %v565 = vunpack.c.h.b16 %v484
        %v566 = vunpack.c.l.b16 %v485
        %v567 = vunpack.c.h.b16 %v485
        %v568 = vunpack.c.l.b16 %v486
        %v569 = vunpack.c.h.b16 %v486
        %v570 = vunpack.c.l.b16 %v487
        %v571 = vunpack.c.h.b16 %v487
        %v572 = vunpack.c.l.b16 %v488
        %v573 = vunpack.c.h.b16 %v488
        %v574 = vunpack.c.l.b16 %v489
        %v575 = vunpack.c.h.b16 %v489
        %v576 = vunpack.c.l.b16 %v490
        %v577 = vunpack.c.h.b16 %v490
        %v578 = vunpack.c.l.b16 %v491
        %v579 = vunpack.c.h.b16 %v491
        %v580 = vunpack.c.l.b16 %v492
        %v581 = vunpack.c.h.b16 %v492
        %v582 = vunpack.c.l.b16 %v493
        %v583 = vunpack.c.h.b16 %v493
        %v584 = vunpack.c.l.b16 %v494
        %v585 = vunpack.c.h.b16 %v494
        %v586 = vunpack.c.l.b16 %v495
        %v587 = vunpack.c.h.b16 %v495
        %v588 = vunpack.c.l.b16 %v496
        %v589 = vunpack.c.h.b16 %v496
        %v590 = vunpack.c.l.b16 %v497
        %v591 = vunpack.c.h.b16 %v497
        %v592 = vunpack.c.l.b16 %v498
        %v593 = vunpack.c.h.b16 %v498
        %v594 = vunpack.c.l.b16 %v499
        %v595 = vunpack.c.h.b16 %v499
        %v596 = vpack.c.b16 %v536, %v532
        %v597 = vpack.c.b16 %v537, %v533
        %v598 = vpack.c.b16 %v538, %v534
        %v599 = vpack.c.b16 %v539, %v535
        %v600 = vpack.c.b16 %v544, %v540
        %v601 = vpack.c.b16 %v545, %v541
        %v602 = vpack.c.b16 %v546, %v542
        %v603 = vpack.c.b16 %v547, %v543
        %v604 = vpack.c.b16 %v552, %v548
        %v605 = vpack.c.b16 %v553, %v549
        %v606 = vpack.c.b16 %v554, %v550
        %v607 = vpack.c.b16 %v555, %v551
        %v608 = vpack.c.b16 %v560, %v556
        %v609 = vpack.c.b16 %v561, %v557
        %v610 = vpack.c.b16 %v562, %v558
        %v611 = vpack.c.b16 %v563, %v559
        %v612 = vpack.c.b16 %v568, %v564
        %v613 = vpack.c.b16 %v569, %v565
        %v614 = vpack.c.b16 %v570, %v566
        %v615 = vpack.c.b16 %v571, %v567
        %v616 = vpack.c.b16 %v576, %v572
        %v617 = vpack.c.b16 %v577, %v573
        %v618 = vpack.c.b16 %v578, %v574
        %v619 = vpack.c.b16 %v579, %v575
        %v620 = vpack.c.b16 %v584, %v580
        %v621 = vpack.c.b16 %v585, %v581
        %v622 = vpack.c.b16 %v586, %v582
        %v623 = vpack.c.b16 %v587, %v583
        %v624 = vpack.c.b16 %v592, %v588
        %v625 = vpack.c.b16 %v593, %v589
        %v626 = vpack.c.b16 %v594, %v590
        %v627 = vpack.c.b16 %v595, %v591
        %660 = vmatprep.subr.bf16.mxu0 %v597
        %661 = vmatpush1.bf16.msra.mxu0 %v596
        %662 = vmatprep.subr.bf16.mxu0 %v601
        %663 = vmatpush1.bf16.msra.mxu0 %v600
        %664 = vmatprep.subr.bf16.mxu0 %v605
        %665 = vmatpush1.bf16.msra.mxu0 %v604
        %666 = vmatprep.subr.bf16.mxu0 %v609
        %667 = vmatpush1.bf16.msra.mxu0 %v608
        %668 = vmatprep.subr.bf16.mxu0 %v613
        %669 = vmatpush1.bf16.msra.mxu0 %v612
        %670 = vmatprep.subr.bf16.mxu0 %v617
        %671 = vmatpush1.bf16.msra.mxu0 %v616
        %672 = vmatprep.subr.bf16.mxu0 %v621
        %673 = vmatpush1.bf16.msra.mxu0 %v620
        %674 = vmatprep.subr.bf16.mxu0 %v625
        %675 = vmatpush1.bf16.msra.mxu0 %v624
        %676 = vmatprep.subr.bf16.mxu0 0
        %677 = vmatpush1.bf16.msra.mxu0 0
        %678 = vmatprep.subr.bf16.mxu0 0
        %679 = vmatpush1.bf16.msra.mxu0 0
        %680 = vmatprep.subr.bf16.mxu0 0
        %681 = vmatpush1.bf16.msra.mxu0 0
        %682 = vmatprep.subr.bf16.mxu0 0
        %683 = vmatpush1.bf16.msra.mxu0 0
        %684 = vmatprep.subr.bf16.mxu0 0
        %685 = vmatpush1.bf16.msra.mxu0 0
        %686 = vmatprep.subr.bf16.mxu0 0
        %687 = vmatpush1.bf16.msra.mxu0 0
        %688 = vmatprep.subr.bf16.mxu0 0
        %689 = vmatpush1.bf16.msra.mxu0 0
        %690 = vmatprep.subr.bf16.mxu0 0
        %691 = vmatpush1.bf16.msra.mxu0 0
        %692 = vmatprep.mubr.bf16.mxu0 0
        %693 = vmatmul.mubr.bf16.gmra.mrb[0].mxu0 %v467
        %v694 = vpop.f32.mrb[0].mxu0
        %v695 = vadd.f32 0.0, %v694
        %v696 = vpop.f32.mrb[0].mxu0
        %v697 = vadd.f32 0.0, %v696
        %v698 = vpop.f32.mrb[0].mxu0
        %v699 = vpop.f32.mrb[0].mxu0
        %700 = vdwg.mxu0
        %701 = vmatprep.subr.bf16.mxu0 %v599
        %702 = vmatpush1.bf16.msra.mxu0 %v598
        %703 = vmatprep.subr.bf16.mxu0 %v603
        %704 = vmatpush1.bf16.msra.mxu0 %v602
        %705 = vmatprep.subr.bf16.mxu0 %v607
        %706 = vmatpush1.bf16.msra.mxu0 %v606
        %707 = vmatprep.subr.bf16.mxu0 %v611
        %708 = vmatpush1.bf16.msra.mxu0 %v610
        %709 = vmatprep.subr.bf16.mxu0 %v615
        %710 = vmatpush1.bf16.msra.mxu0 %v614
        %711 = vmatprep.subr.bf16.mxu0 %v619
        %712 = vmatpush1.bf16.msra.mxu0 %v618
        %713 = vmatprep.subr.bf16.mxu0 %v623
        %714 = vmatpush1.bf16.msra.mxu0 %v622
        %715 = vmatprep.subr.bf16.mxu0 %v627
        %716 = vmatpush1.bf16.msra.mxu0 %v626
        %717 = vmatprep.subr.bf16.mxu0 0
        %718 = vmatpush1.bf16.msra.mxu0 0
        %719 = vmatprep.subr.bf16.mxu0 0
        %720 = vmatpush1.bf16.msra.mxu0 0
        %721 = vmatprep.subr.bf16.mxu0 0
        %722 = vmatpush1.bf16.msra.mxu0 0
        %723 = vmatprep.subr.bf16.mxu0 0
        %724 = vmatpush1.bf16.msra.mxu0 0
        %725 = vmatprep.subr.bf16.mxu0 0
        %726 = vmatpush1.bf16.msra.mxu0 0
        %727 = vmatprep.subr.bf16.mxu0 0
        %728 = vmatpush1.bf16.msra.mxu0 0
        %729 = vmatprep.subr.bf16.mxu0 0
        %730 = vmatpush1.bf16.msra.mxu0 0
        %731 = vmatprep.subr.bf16.mxu0 0
        %732 = vmatpush1.bf16.msra.mxu0 0
        %733 = vmatprep.mubr.bf16.mxu0 0
        %734 = vmatmul.mubr.bf16.gmra.mrb[0].mxu0 %v467
        %v735 = vpop.f32.mrb[0].mxu0
        %v736 = vadd.f32 0.0, %v735
        %v737 = vpop.f32.mrb[0].mxu0
        %v738 = vadd.f32 0.0, %v737
        %v739 = vpop.f32.mrb[0].mxu0
        %v740 = vpop.f32.mrb[0].mxu0
        %741 = vdwg.mxu0
        %v774 = vunpack.c.l.b16 %v434
        %v775 = vunpack.c.h.b16 %v434
        %v776 = vunpack.c.l.b16 %v435
        %v777 = vunpack.c.h.b16 %v435
        %v778 = vunpack.c.l.b16 %v436
        %v779 = vunpack.c.h.b16 %v436
        %v780 = vunpack.c.l.b16 %v437
        %v781 = vunpack.c.h.b16 %v437
        %v782 = vunpack.c.l.b16 %v438
        %v783 = vunpack.c.h.b16 %v438
        %v784 = vunpack.c.l.b16 %v439
        %v785 = vunpack.c.h.b16 %v439
        %v786 = vunpack.c.l.b16 %v440
        %v787 = vunpack.c.h.b16 %v440
        %v788 = vunpack.c.l.b16 %v441
        %v789 = vunpack.c.h.b16 %v441
        %v790 = vunpack.c.l.b16 %v442
        %v791 = vunpack.c.h.b16 %v442
        %v792 = vunpack.c.l.b16 %v443
        %v793 = vunpack.c.h.b16 %v443
        %v794 = vunpack.c.l.b16 %v444
        %v795 = vunpack.c.h.b16 %v444
        %v796 = vunpack.c.l.b16 %v445
        %v797 = vunpack.c.h.b16 %v445
        %v798 = vunpack.c.l.b16 %v446
        %v799 = vunpack.c.h.b16 %v446
        %v800 = vunpack.c.l.b16 %v447
        %v801 = vunpack.c.h.b16 %v447
        %v802 = vunpack.c.l.b16 %v448
        %v803 = vunpack.c.h.b16 %v448
        %v804 = vunpack.c.l.b16 %v449
        %v805 = vunpack.c.h.b16 %v449
        %v806 = vunpack.c.l.b16 %v450
        %v807 = vunpack.c.h.b16 %v450
        %v808 = vunpack.c.l.b16 %v451
        %v809 = vunpack.c.h.b16 %v451
        %v810 = vunpack.c.l.b16 %v452
        %v811 = vunpack.c.h.b16 %v452
        %v812 = vunpack.c.l.b16 %v453
        %v813 = vunpack.c.h.b16 %v453
        %v814 = vunpack.c.l.b16 %v454
        %v815 = vunpack.c.h.b16 %v454
        %v816 = vunpack.c.l.b16 %v455
        %v817 = vunpack.c.h.b16 %v455
        %v818 = vunpack.c.l.b16 %v456
        %v819 = vunpack.c.h.b16 %v456
        %v820 = vunpack.c.l.b16 %v457
        %v821 = vunpack.c.h.b16 %v457
        %v822 = vunpack.c.l.b16 %v458
        %v823 = vunpack.c.h.b16 %v458
        %v824 = vunpack.c.l.b16 %v459
        %v825 = vunpack.c.h.b16 %v459
        %v826 = vunpack.c.l.b16 %v460
        %v827 = vunpack.c.h.b16 %v460
        %v828 = vunpack.c.l.b16 %v461
        %v829 = vunpack.c.h.b16 %v461
        %v830 = vunpack.c.l.b16 %v462
        %v831 = vunpack.c.h.b16 %v462
        %v832 = vunpack.c.l.b16 %v463
        %v833 = vunpack.c.h.b16 %v463
        %v834 = vunpack.c.l.b16 %v464
        %v835 = vunpack.c.h.b16 %v464
        %v836 = vunpack.c.l.b16 %v465
        %v837 = vunpack.c.h.b16 %v465
        %v838 = vpack.c.b16 %v778, %v774
        %v839 = vpack.c.b16 %v779, %v775
        %v840 = vpack.c.b16 %v780, %v776
        %v841 = vpack.c.b16 %v781, %v777
        %v842 = vpack.c.b16 %v786, %v782
        %v843 = vpack.c.b16 %v787, %v783
        %v844 = vpack.c.b16 %v788, %v784
        %v845 = vpack.c.b16 %v789, %v785
        %v846 = vpack.c.b16 %v794, %v790
        %v847 = vpack.c.b16 %v795, %v791
        %v848 = vpack.c.b16 %v796, %v792
        %v849 = vpack.c.b16 %v797, %v793
        %v850 = vpack.c.b16 %v802, %v798
        %v851 = vpack.c.b16 %v803, %v799
        %v852 = vpack.c.b16 %v804, %v800
        %v853 = vpack.c.b16 %v805, %v801
        %v854 = vpack.c.b16 %v810, %v806
        %v855 = vpack.c.b16 %v811, %v807
        %v856 = vpack.c.b16 %v812, %v808
        %v857 = vpack.c.b16 %v813, %v809
        %v858 = vpack.c.b16 %v818, %v814
        %v859 = vpack.c.b16 %v819, %v815
        %v860 = vpack.c.b16 %v820, %v816
        %v861 = vpack.c.b16 %v821, %v817
        %v862 = vpack.c.b16 %v826, %v822
        %v863 = vpack.c.b16 %v827, %v823
        %v864 = vpack.c.b16 %v828, %v824
        %v865 = vpack.c.b16 %v829, %v825
        %v866 = vpack.c.b16 %v834, %v830
        %v867 = vpack.c.b16 %v835, %v831
        %v868 = vpack.c.b16 %v836, %v832
        %v869 = vpack.c.b16 %v837, %v833
        %902 = vmatprep.subr.bf16.mxu0 %v839
        %903 = vmatpush1.bf16.msra.mxu0 %v838
        %904 = vmatprep.subr.bf16.mxu0 %v843
        %905 = vmatpush1.bf16.msra.mxu0 %v842
        %906 = vmatprep.subr.bf16.mxu0 %v847
        %907 = vmatpush1.bf16.msra.mxu0 %v846
        %908 = vmatprep.subr.bf16.mxu0 %v851
        %909 = vmatpush1.bf16.msra.mxu0 %v850
        %910 = vmatprep.subr.bf16.mxu0 %v855
        %911 = vmatpush1.bf16.msra.mxu0 %v854
        %912 = vmatprep.subr.bf16.mxu0 %v859
        %913 = vmatpush1.bf16.msra.mxu0 %v858
        %914 = vmatprep.subr.bf16.mxu0 %v863
        %915 = vmatpush1.bf16.msra.mxu0 %v862
        %916 = vmatprep.subr.bf16.mxu0 %v867
        %917 = vmatpush1.bf16.msra.mxu0 %v866
        %918 = vmatprep.subr.bf16.mxu0 0
        %919 = vmatpush1.bf16.msra.mxu0 0
        %920 = vmatprep.subr.bf16.mxu0 0
        %921 = vmatpush1.bf16.msra.mxu0 0
        %922 = vmatprep.subr.bf16.mxu0 0
        %923 = vmatpush1.bf16.msra.mxu0 0
        %924 = vmatprep.subr.bf16.mxu0 0
        %925 = vmatpush1.bf16.msra.mxu0 0
        %926 = vmatprep.subr.bf16.mxu0 0
        %927 = vmatpush1.bf16.msra.mxu0 0
        %928 = vmatprep.subr.bf16.mxu0 0
        %929 = vmatpush1.bf16.msra.mxu0 0
        %930 = vmatprep.subr.bf16.mxu0 0
        %931 = vmatpush1.bf16.msra.mxu0 0
        %932 = vmatprep.subr.bf16.mxu0 0
        %933 = vmatpush1.bf16.msra.mxu0 0
        %934 = vmatprep.mubr.bf16.mxu0 0
        %935 = vmatmul.mubr.bf16.gmra.mrb[0].mxu0 %v433
        %v936 = vpop.f32.mrb[0].mxu0
        %v937 = vadd.f32 %v695, %v936
        %v938 = vpop.f32.mrb[0].mxu0
        %v939 = vadd.f32 %v697, %v938
        %v940 = vpop.f32.mrb[0].mxu0
        %v941 = vpop.f32.mrb[0].mxu0
        %942 = vdwg.mxu0
        %943 = vmatprep.subr.bf16.mxu0 %v841
        %944 = vmatpush1.bf16.msra.mxu0 %v840
        %945 = vmatprep.subr.bf16.mxu0 %v845
        %946 = vmatpush1.bf16.msra.mxu0 %v844
        %947 = vmatprep.subr.bf16.mxu0 %v849
        %948 = vmatpush1.bf16.msra.mxu0 %v848
        %949 = vmatprep.subr.bf16.mxu0 %v853
        %950 = vmatpush1.bf16.msra.mxu0 %v852
        %951 = vmatprep.subr.bf16.mxu0 %v857
        %952 = vmatpush1.bf16.msra.mxu0 %v856
        %953 = vmatprep.subr.bf16.mxu0 %v861
        %954 = vmatpush1.bf16.msra.mxu0 %v860
        %955 = vmatprep.subr.bf16.mxu0 %v865
        %956 = vmatpush1.bf16.msra.mxu0 %v864
        %957 = vmatprep.subr.bf16.mxu0 %v869
        %958 = vmatpush1.bf16.msra.mxu0 %v868
        %959 = vmatprep.subr.bf16.mxu0 0
        %960 = vmatpush1.bf16.msra.mxu0 0
        %961 = vmatprep.subr.bf16.mxu0 0
        %962 = vmatpush1.bf16.msra.mxu0 0
        %963 = vmatprep.subr.bf16.mxu0 0
        %964 = vmatpush1.bf16.msra.mxu0 0
        %965 = vmatprep.subr.bf16.mxu0 0
        %966 = vmatpush1.bf16.msra.mxu0 0
        %967 = vmatprep.subr.bf16.mxu0 0
        %968 = vmatpush1.bf16.msra.mxu0 0
        %969 = vmatprep.subr.bf16.mxu0 0
        %970 = vmatpush1.bf16.msra.mxu0 0
        %971 = vmatprep.subr.bf16.mxu0 0
        %972 = vmatpush1.bf16.msra.mxu0 0
        %973 = vmatprep.subr.bf16.mxu0 0
        %974 = vmatpush1.bf16.msra.mxu0 0
        %975 = vmatprep.mubr.bf16.mxu0 0
        %976 = vmatmul.mubr.bf16.gmra.mrb[0].mxu0 %v433
        %v977 = vpop.f32.mrb[0].mxu0
        %v978 = vadd.f32 %v736, %v977
        %v979 = vpop.f32.mrb[0].mxu0
        %v980 = vadd.f32 %v738, %v979
        %v981 = vpop.f32.mrb[0].mxu0
        %v982 = vpop.f32.mrb[0].mxu0
        %983 = vdwg.mxu0
        %v984 = vld [vmem:[%s5] sm:$0xf]
        %v986 = vlaneseq
        %v987 = vshrl.u32 %v986, 7
        %v988 = vsub.s32 0, %v987
        %v989 = vrot.slane %v984, %v988
        %v990 = vlaneseq
        %v991 = vshrl.u32 %v990, 7
        %v992 = vsub.s32 1, %v991
        %v993 = vrot.slane %v984, %v992
        %v994 = vlaneseq
        %v995 = vshrl.u32 %v994, 7
        %v996 = vsub.s32 2, %v995
        %v997 = vrot.slane %v984, %v996
        %v998 = vlaneseq
        %v999 = vshrl.u32 %v998, 7
        %v1000 = vsub.s32 3, %v999
        %v1001 = vrot.slane %v984, %v1000
        %v1006 = vadd.f32 %v937, %v989
        %v1007 = vadd.f32 %v939, %v993
        %v1008 = vadd.f32 %v978, %v997
        %v1009 = vadd.f32 %v980, %v1001
        %v1010 = vxor.u32 %v1006, 2147483648
        %v1011 = vxor.u32 %v1007, 2147483648
        %v1012 = vxor.u32 %v1008, 2147483648
        %v1013 = vxor.u32 %v1009, 2147483648
        %v1014 = vmul.f32 %v1010, 1.442695
        %v1015 = vpow.pop %v1014
        %v1016 = vmul.f32 %v1011, 1.442695
        %v1017 = vpow.pop %v1016
        %v1018 = vmul.f32 %v1012, 1.442695
        %v1019 = vpow.pop %v1018
        %v1020 = vmul.f32 %v1013, 1.442695
        %v1021 = vpow.pop %v1020
        %v1022 = vadd.f32 %v1015, 1.0
        %v1023 = vadd.f32 %v1017, 1.0
        %v1024 = vadd.f32 %v1019, 1.0
        %v1025 = vadd.f32 %v1021, 1.0
        %v1026 = vrcp.pop %v1022
        %v1027 = vmul.f32 1.0, %v1026
        %v1028 = vrcp.pop %v1023
        %v1029 = vmul.f32 1.0, %v1028
        %v1030 = vrcp.pop %v1024
        %v1031 = vmul.f32 1.0, %v1030
        %v1032 = vrcp.pop %v1025
        %v1033 = vmul.f32 1.0, %v1032
        %v1034 = vmul.f32 %v1031, 2.0
        %v1035 = vsub.f32 %v1034, 1.0
        %v1036 = vld [vmem:[#allocation3] sm:$0xff]
        %v1037 = vmul.f32 %v1029, %v1036
        %v1038 = vmul.f32 %v1027, %v1035
        %v1039 = vadd.f32 %v1037, %v1038
        %v1040 = vtanh.pop %v1039
        %v1041 = vmul.f32 %v1033, %v1040
        %1042 = vst [vmem:[#allocation3] sm:$0xff] %v1039
        %1043 = vst [vmem:[#allocation2] sm:$0xff] %v1041
        %v1044 = vpack.c.bf16 %v1041, %v1041
        %v1045 = vld [vmem:[#allocation7] sm:$0xff]
        %v1046 = vld [vmem:[#allocation7 + $0x8] sm:$0xff]
        %v1047 = vld [vmem:[#allocation7 + $0x10] sm:$0xff]
        %v1048 = vld [vmem:[#allocation7 + $0x18] sm:$0xff]
        %v1049 = vld [vmem:[#allocation7 + $0x20] sm:$0xff]
        %v1050 = vld [vmem:[#allocation7 + $0x28] sm:$0xff]
        %v1051 = vld [vmem:[#allocation7 + $0x30] sm:$0xff]
        %v1052 = vld [vmem:[#allocation7 + $0x38] sm:$0xff]
        %v1053 = vld [vmem:[#allocation7 + $0x40] sm:$0xff]
        %v1054 = vld [vmem:[#allocation7 + $0x48] sm:$0xff]
        %v1055 = vld [vmem:[#allocation7 + $0x50] sm:$0xff]
        %v1056 = vld [vmem:[#allocation7 + $0x58] sm:$0xff]
        %v1057 = vld [vmem:[#allocation7 + $0x60] sm:$0xff]
        %v1058 = vld [vmem:[#allocation7 + $0x68] sm:$0xff]
        %v1059 = vld [vmem:[#allocation7 + $0x70] sm:$0xff]
        %v1060 = vld [vmem:[#allocation7 + $0x78] sm:$0xff]
        %v1061 = vld [vmem:[#allocation7 + $0x80] sm:$0xff]
        %v1062 = vld [vmem:[#allocation7 + $0x88] sm:$0xff]
        %v1063 = vld [vmem:[#allocation7 + $0x90] sm:$0xff]
        %v1064 = vld [vmem:[#allocation7 + $0x98] sm:$0xff]
        %v1065 = vld [vmem:[#allocation7 + $0xa0] sm:$0xff]
        %v1066 = vld [vmem:[#allocation7 + $0xa8] sm:$0xff]
        %v1067 = vld [vmem:[#allocation7 + $0xb0] sm:$0xff]
        %v1068 = vld [vmem:[#allocation7 + $0xb8] sm:$0xff]
        %v1069 = vld [vmem:[#allocation7 + $0xc0] sm:$0xff]
        %v1070 = vld [vmem:[#allocation7 + $0xc8] sm:$0xff]
        %v1071 = vld [vmem:[#allocation7 + $0xd0] sm:$0xff]
        %v1072 = vld [vmem:[#allocation7 + $0xd8] sm:$0xff]
        %v1073 = vld [vmem:[#allocation7 + $0xe0] sm:$0xff]
        %v1074 = vld [vmem:[#allocation7 + $0xe8] sm:$0xff]
        %v1075 = vld [vmem:[#allocation7 + $0xf0] sm:$0xff]
        %v1076 = vld [vmem:[#allocation7 + $0xf8] sm:$0xff]
        %s1077 = scalar_lea.vmem [#allocation2], 8
        %v1078 = vld [vmem:[%s1077] sm:$0xff]
        %v1079 = vpack.c.bf16 %v1078, %v1078
        %v1080 = vld [vmem:[#allocation10] sm:$0xff]
        %v1081 = vld [vmem:[#allocation10 + $0x8] sm:$0xff]
        %v1082 = vld [vmem:[#allocation10 + $0x10] sm:$0xff]
        %v1083 = vld [vmem:[#allocation10 + $0x18] sm:$0xff]
        %v1084 = vld [vmem:[#allocation10 + $0x20] sm:$0xff]
        %v1085 = vld [vmem:[#allocation10 + $0x28] sm:$0xff]
        %v1086 = vld [vmem:[#allocation10 + $0x30] sm:$0xff]
        %v1087 = vld [vmem:[#allocation10 + $0x38] sm:$0xff]
        %v1088 = vld [vmem:[#allocation10 + $0x40] sm:$0xff]
        %v1089 = vld [vmem:[#allocation10 + $0x48] sm:$0xff]
        %v1090 = vld [vmem:[#allocation10 + $0x50] sm:$0xff]
        %v1091 = vld [vmem:[#allocation10 + $0x58] sm:$0xff]
        %v1092 = vld [vmem:[#allocation10 + $0x60] sm:$0xff]
        %v1093 = vld [vmem:[#allocation10 + $0x68] sm:$0xff]
        %v1094 = vld [vmem:[#allocation10 + $0x70] sm:$0xff]
        %v1095 = vld [vmem:[#allocation10 + $0x78] sm:$0xff]
        %v1096 = vld [vmem:[#allocation10 + $0x80] sm:$0xff]
        %v1097 = vld [vmem:[#allocation10 + $0x88] sm:$0xff]
        %v1098 = vld [vmem:[#allocation10 + $0x90] sm:$0xff]
        %v1099 = vld [vmem:[#allocation10 + $0x98] sm:$0xff]
        %v1100 = vld [vmem:[#allocation10 + $0xa0] sm:$0xff]
        %v1101 = vld [vmem:[#allocation10 + $0xa8] sm:$0xff]
        %v1102 = vld [vmem:[#allocation10 + $0xb0] sm:$0xff]
        %v1103 = vld [vmem:[#allocation10 + $0xb8] sm:$0xff]
        %v1104 = vld [vmem:[#allocation10 + $0xc0] sm:$0xff]
        %v1105 = vld [vmem:[#allocation10 + $0xc8] sm:$0xff]
        %v1106 = vld [vmem:[#allocation10 + $0xd0] sm:$0xff]
        %v1107 = vld [vmem:[#allocation10 + $0xd8] sm:$0xff]
        %v1108 = vld [vmem:[#allocation10 + $0xe0] sm:$0xff]
        %v1109 = vld [vmem:[#allocation10 + $0xe8] sm:$0xff]
        %v1110 = vld [vmem:[#allocation10 + $0xf0] sm:$0xff]
        %v1111 = vld [vmem:[#allocation10 + $0xf8] sm:$0xff]
        %v1144 = vunpack.c.l.b16 %v1080
        %v1145 = vunpack.c.h.b16 %v1080
        %v1146 = vunpack.c.l.b16 %v1081
        %v1147 = vunpack.c.h.b16 %v1081
        %v1148 = vunpack.c.l.b16 %v1082
        %v1149 = vunpack.c.h.b16 %v1082
        %v1150 = vunpack.c.l.b16 %v1083
        %v1151 = vunpack.c.h.b16 %v1083
        %v1152 = vunpack.c.l.b16 %v1084
        %v1153 = vunpack.c.h.b16 %v1084
        %v1154 = vunpack.c.l.b16 %v1085
        %v1155 = vunpack.c.h.b16 %v1085
        %v1156 = vunpack.c.l.b16 %v1086
        %v1157 = vunpack.c.h.b16 %v1086
        %v1158 = vunpack.c.l.b16 %v1087
        %v1159 = vunpack.c.h.b16 %v1087
        %v1160 = vunpack.c.l.b16 %v1088
        %v1161 = vunpack.c.h.b16 %v1088
        %v1162 = vunpack.c.l.b16 %v1089
        %v1163 = vunpack.c.h.b16 %v1089
        %v1164 = vunpack.c.l.b16 %v1090
        %v1165 = vunpack.c.h.b16 %v1090
        %v1166 = vunpack.c.l.b16 %v1091
        %v1167 = vunpack.c.h.b16 %v1091
        %v1168 = vunpack.c.l.b16 %v1092
        %v1169 = vunpack.c.h.b16 %v1092
        %v1170 = vunpack.c.l.b16 %v1093
        %v1171 = vunpack.c.h.b16 %v1093
        %v1172 = vunpack.c.l.b16 %v1094
        %v1173 = vunpack.c.h.b16 %v1094
        %v1174 = vunpack.c.l.b16 %v1095
        %v1175 = vunpack.c.h.b16 %v1095
        %v1176 = vunpack.c.l.b16 %v1096
        %v1177 = vunpack.c.h.b16 %v1096
        %v1178 = vunpack.c.l.b16 %v1097
        %v1179 = vunpack.c.h.b16 %v1097
        %v1180 = vunpack.c.l.b16 %v1098
        %v1181 = vunpack.c.h.b16 %v1098
        %v1182 = vunpack.c.l.b16 %v1099
        %v1183 = vunpack.c.h.b16 %v1099
        %v1184 = vunpack.c.l.b16 %v1100
        %v1185 = vunpack.c.h.b16 %v1100
        %v1186 = vunpack.c.l.b16 %v1101
        %v1187 = vunpack.c.h.b16 %v1101
        %v1188 = vunpack.c.l.b16 %v1102
        %v1189 = vunpack.c.h.b16 %v1102
        %v1190 = vunpack.c.l.b16 %v1103
        %v1191 = vunpack.c.h.b16 %v1103
        %v1192 = vunpack.c.l.b16 %v1104
        %v1193 = vunpack.c.h.b16 %v1104
        %v1194 = vunpack.c.l.b16 %v1105
        %v1195 = vunpack.c.h.b16 %v1105
        %v1196 = vunpack.c.l.b16 %v1106
        %v1197 = vunpack.c.h.b16 %v1106
        %v1198 = vunpack.c.l.b16 %v1107
        %v1199 = vunpack.c.h.b16 %v1107
        %v1200 = vunpack.c.l.b16 %v1108
        %v1201 = vunpack.c.h.b16 %v1108
        %v1202 = vunpack.c.l.b16 %v1109
        %v1203 = vunpack.c.h.b16 %v1109
        %v1204 = vunpack.c.l.b16 %v1110
        %v1205 = vunpack.c.h.b16 %v1110
        %v1206 = vunpack.c.l.b16 %v1111
        %v1207 = vunpack.c.h.b16 %v1111
        %v1208 = vpack.c.b16 %v1148, %v1144
        %v1209 = vpack.c.b16 %v1149, %v1145
        %v1210 = vpack.c.b16 %v1150, %v1146
        %v1211 = vpack.c.b16 %v1151, %v1147
        %v1212 = vpack.c.b16 %v1156, %v1152
        %v1213 = vpack.c.b16 %v1157, %v1153
        %v1214 = vpack.c.b16 %v1158, %v1154
        %v1215 = vpack.c.b16 %v1159, %v1155
        %v1216 = vpack.c.b16 %v1164, %v1160
        %v1217 = vpack.c.b16 %v1165, %v1161
        %v1218 = vpack.c.b16 %v1166, %v1162
        %v1219 = vpack.c.b16 %v1167, %v1163
        %v1220 = vpack.c.b16 %v1172, %v1168
        %v1221 = vpack.c.b16 %v1173, %v1169
        %v1222 = vpack.c.b16 %v1174, %v1170
        %v1223 = vpack.c.b16 %v1175, %v1171
        %v1224 = vpack.c.b16 %v1180, %v1176
        %v1225 = vpack.c.b16 %v1181, %v1177
        %v1226 = vpack.c.b16 %v1182, %v1178
        %v1227 = vpack.c.b16 %v1183, %v1179
        %v1228 = vpack.c.b16 %v1188, %v1184
        %v1229 = vpack.c.b16 %v1189, %v1185
        %v1230 = vpack.c.b16 %v1190, %v1186
        %v1231 = vpack.c.b16 %v1191, %v1187
        %v1232 = vpack.c.b16 %v1196, %v1192
        %v1233 = vpack.c.b16 %v1197, %v1193
        %v1234 = vpack.c.b16 %v1198, %v1194
        %v1235 = vpack.c.b16 %v1199, %v1195
        %v1236 = vpack.c.b16 %v1204, %v1200
        %v1237 = vpack.c.b16 %v1205, %v1201
        %v1238 = vpack.c.b16 %v1206, %v1202
        %v1239 = vpack.c.b16 %v1207, %v1203
        %1272 = vmatprep.subr.bf16.mxu0 %v1209
        %1273 = vmatpush1.bf16.msra.mxu0 %v1208
        %1274 = vmatprep.subr.bf16.mxu0 %v1213
        %1275 = vmatpush1.bf16.msra.mxu0 %v1212
        %1276 = vmatprep.subr.bf16.mxu0 %v1217
        %1277 = vmatpush1.bf16.msra.mxu0 %v1216
        %1278 = vmatprep.subr.bf16.mxu0 %v1221
        %1279 = vmatpush1.bf16.msra.mxu0 %v1220
        %1280 = vmatprep.subr.bf16.mxu0 %v1225
        %1281 = vmatpush1.bf16.msra.mxu0 %v1224
        %1282 = vmatprep.subr.bf16.mxu0 %v1229
        %1283 = vmatpush1.bf16.msra.mxu0 %v1228
        %1284 = vmatprep.subr.bf16.mxu0 %v1233
        %1285 = vmatpush1.bf16.msra.mxu0 %v1232
        %1286 = vmatprep.subr.bf16.mxu0 %v1237
        %1287 = vmatpush1.bf16.msra.mxu0 %v1236
        %1288 = vmatprep.subr.bf16.mxu0 0
        %1289 = vmatpush1.bf16.msra.mxu0 0
        %1290 = vmatprep.subr.bf16.mxu0 0
        %1291 = vmatpush1.bf16.msra.mxu0 0
        %1292 = vmatprep.subr.bf16.mxu0 0
        %1293 = vmatpush1.bf16.msra.mxu0 0
        %1294 = vmatprep.subr.bf16.mxu0 0
        %1295 = vmatpush1.bf16.msra.mxu0 0
        %1296 = vmatprep.subr.bf16.mxu0 0
        %1297 = vmatpush1.bf16.msra.mxu0 0
        %1298 = vmatprep.subr.bf16.mxu0 0
        %1299 = vmatpush1.bf16.msra.mxu0 0
        %1300 = vmatprep.subr.bf16.mxu0 0
        %1301 = vmatpush1.bf16.msra.mxu0 0
        %1302 = vmatprep.subr.bf16.mxu0 0
        %1303 = vmatpush1.bf16.msra.mxu0 0
        %1304 = vmatprep.mubr.bf16.mxu0 0
        %1305 = vmatmul.mubr.bf16.gmra.mrb[0].mxu0 %v1079
        %v1306 = vpop.f32.mrb[0].mxu0
        %v1307 = vadd.f32 0.0, %v1306
        %v1308 = vpop.f32.mrb[0].mxu0
        %v1309 = vadd.f32 0.0, %v1308
        %v1310 = vpop.f32.mrb[0].mxu0
        %v1311 = vpop.f32.mrb[0].mxu0
        %1312 = vdwg.mxu0
        %1313 = vmatprep.subr.bf16.mxu0 %v1211
        %1314 = vmatpush1.bf16.msra.mxu0 %v1210
        %1315 = vmatprep.subr.bf16.mxu0 %v1215
        %1316 = vmatpush1.bf16.msra.mxu0 %v1214
        %1317 = vmatprep.subr.bf16.mxu0 %v1219
        %1318 = vmatpush1.bf16.msra.mxu0 %v1218
        %1319 = vmatprep.subr.bf16.mxu0 %v1223
        %1320 = vmatpush1.bf16.msra.mxu0 %v1222
        %1321 = vmatprep.subr.bf16.mxu0 %v1227
        %1322 = vmatpush1.bf16.msra.mxu0 %v1226
        %1323 = vmatprep.subr.bf16.mxu0 %v1231
        %1324 = vmatpush1.bf16.msra.mxu0 %v1230
        %1325 = vmatprep.subr.bf16.mxu0 %v1235
        %1326 = vmatpush1.bf16.msra.mxu0 %v1234
        %1327 = vmatprep.subr.bf16.mxu0 %v1239
        %1328 = vmatpush1.bf16.msra.mxu0 %v1238
        %1329 = vmatprep.subr.bf16.mxu0 0
        %1330 = vmatpush1.bf16.msra.mxu0 0
        %1331 = vmatprep.subr.bf16.mxu0 0
        %1332 = vmatpush1.bf16.msra.mxu0 0
        %1333 = vmatprep.subr.bf16.mxu0 0
        %1334 = vmatpush1.bf16.msra.mxu0 0
        %1335 = vmatprep.subr.bf16.mxu0 0
        %1336 = vmatpush1.bf16.msra.mxu0 0
        %1337 = vmatprep.subr.bf16.mxu0 0
        %1338 = vmatpush1.bf16.msra.mxu0 0
        %1339 = vmatprep.subr.bf16.mxu0 0
        %1340 = vmatpush1.bf16.msra.mxu0 0
        %1341 = vmatprep.subr.bf16.mxu0 0
        %1342 = vmatpush1.bf16.msra.mxu0 0
        %1343 = vmatprep.subr.bf16.mxu0 0
        %1344 = vmatpush1.bf16.msra.mxu0 0
        %1345 = vmatprep.mubr.bf16.mxu0 0
        %1346 = vmatmul.mubr.bf16.gmra.mrb[0].mxu0 %v1079
        %v1347 = vpop.f32.mrb[0].mxu0
        %v1348 = vadd.f32 0.0, %v1347
        %v1349 = vpop.f32.mrb[0].mxu0
        %v1350 = vadd.f32 0.0, %v1349
        %v1351 = vpop.f32.mrb[0].mxu0
        %v1352 = vpop.f32.mrb[0].mxu0
        %1353 = vdwg.mxu0
        %v1386 = vunpack.c.l.b16 %v1045
        %v1387 = vunpack.c.h.b16 %v1045
        %v1388 = vunpack.c.l.b16 %v1046
        %v1389 = vunpack.c.h.b16 %v1046
        %v1390 = vunpack.c.l.b16 %v1047
        %v1391 = vunpack.c.h.b16 %v1047
        %v1392 = vunpack.c.l.b16 %v1048
        %v1393 = vunpack.c.h.b16 %v1048
        %v1394 = vunpack.c.l.b16 %v1049
        %v1395 = vunpack.c.h.b16 %v1049
        %v1396 = vunpack.c.l.b16 %v1050
        %v1397 = vunpack.c.h.b16 %v1050
        %v1398 = vunpack.c.l.b16 %v1051
        %v1399 = vunpack.c.h.b16 %v1051
        %v1400 = vunpack.c.l.b16 %v1052
        %v1401 = vunpack.c.h.b16 %v1052
        %v1402 = vunpack.c.l.b16 %v1053
        %v1403 = vunpack.c.h.b16 %v1053
        %v1404 = vunpack.c.l.b16 %v1054
        %v1405 = vunpack.c.h.b16 %v1054
        %v1406 = vunpack.c.l.b16 %v1055
        %v1407 = vunpack.c.h.b16 %v1055
        %v1408 = vunpack.c.l.b16 %v1056
        %v1409 = vunpack.c.h.b16 %v1056
        %v1410 = vunpack.c.l.b16 %v1057
        %v1411 = vunpack.c.h.b16 %v1057
        %v1412 = vunpack.c.l.b16 %v1058
        %v1413 = vunpack.c.h.b16 %v1058
        %v1414 = vunpack.c.l.b16 %v1059
        %v1415 = vunpack.c.h.b16 %v1059
        %v1416 = vunpack.c.l.b16 %v1060
        %v1417 = vunpack.c.h.b16 %v1060
        %v1418 = vunpack.c.l.b16 %v1061
        %v1419 = vunpack.c.h.b16 %v1061
        %v1420 = vunpack.c.l.b16 %v1062
        %v1421 = vunpack.c.h.b16 %v1062
        %v1422 = vunpack.c.l.b16 %v1063
        %v1423 = vunpack.c.h.b16 %v1063
        %v1424 = vunpack.c.l.b16 %v1064
        %v1425 = vunpack.c.h.b16 %v1064
        %v1426 = vunpack.c.l.b16 %v1065
        %v1427 = vunpack.c.h.b16 %v1065
        %v1428 = vunpack.c.l.b16 %v1066
        %v1429 = vunpack.c.h.b16 %v1066
        %v1430 = vunpack.c.l.b16 %v1067
        %v1431 = vunpack.c.h.b16 %v1067
        %v1432 = vunpack.c.l.b16 %v1068
        %v1433 = vunpack.c.h.b16 %v1068
        %v1434 = vunpack.c.l.b16 %v1069
        %v1435 = vunpack.c.h.b16 %v1069
        %v1436 = vunpack.c.l.b16 %v1070
        %v1437 = vunpack.c.h.b16 %v1070
        %v1438 = vunpack.c.l.b16 %v1071
        %v1439 = vunpack.c.h.b16 %v1071
        %v1440 = vunpack.c.l.b16 %v1072
        %v1441 = vunpack.c.h.b16 %v1072
        %v1442 = vunpack.c.l.b16 %v1073
        %v1443 = vunpack.c.h.b16 %v1073
        %v1444 = vunpack.c.l.b16 %v1074
        %v1445 = vunpack.c.h.b16 %v1074
        %v1446 = vunpack.c.l.b16 %v1075
        %v1447 = vunpack.c.h.b16 %v1075
        %v1448 = vunpack.c.l.b16 %v1076
        %v1449 = vunpack.c.h.b16 %v1076
        %v1450 = vpack.c.b16 %v1390, %v1386
        %v1451 = vpack.c.b16 %v1391, %v1387
        %v1452 = vpack.c.b16 %v1392, %v1388
        %v1453 = vpack.c.b16 %v1393, %v1389
        %v1454 = vpack.c.b16 %v1398, %v1394
        %v1455 = vpack.c.b16 %v1399, %v1395
        %v1456 = vpack.c.b16 %v1400, %v1396
        %v1457 = vpack.c.b16 %v1401, %v1397
        %v1458 = vpack.c.b16 %v1406, %v1402
        %v1459 = vpack.c.b16 %v1407, %v1403
        %v1460 = vpack.c.b16 %v1408, %v1404
        %v1461 = vpack.c.b16 %v1409, %v1405
        %v1462 = vpack.c.b16 %v1414, %v1410
        %v1463 = vpack.c.b16 %v1415, %v1411
        %v1464 = vpack.c.b16 %v1416, %v1412
        %v1465 = vpack.c.b16 %v1417, %v1413
        %v1466 = vpack.c.b16 %v1422, %v1418
        %v1467 = vpack.c.b16 %v1423, %v1419
        %v1468 = vpack.c.b16 %v1424, %v1420
        %v1469 = vpack.c.b16 %v1425, %v1421
        %v1470 = vpack.c.b16 %v1430, %v1426
        %v1471 = vpack.c.b16 %v1431, %v1427
        %v1472 = vpack.c.b16 %v1432, %v1428
        %v1473 = vpack.c.b16 %v1433, %v1429
        %v1474 = vpack.c.b16 %v1438, %v1434
        %v1475 = vpack.c.b16 %v1439, %v1435
        %v1476 = vpack.c.b16 %v1440, %v1436
        %v1477 = vpack.c.b16 %v1441, %v1437
        %v1478 = vpack.c.b16 %v1446, %v1442
        %v1479 = vpack.c.b16 %v1447, %v1443
        %v1480 = vpack.c.b16 %v1448, %v1444
        %v1481 = vpack.c.b16 %v1449, %v1445
        %1514 = vmatprep.subr.bf16.mxu0 %v1451
        %1515 = vmatpush1.bf16.msra.mxu0 %v1450
        %1516 = vmatprep.subr.bf16.mxu0 %v1455
        %1517 = vmatpush1.bf16.msra.mxu0 %v1454
        %1518 = vmatprep.subr.bf16.mxu0 %v1459
        %1519 = vmatpush1.bf16.msra.mxu0 %v1458
        %1520 = vmatprep.subr.bf16.mxu0 %v1463
        %1521 = vmatpush1.bf16.msra.mxu0 %v1462
        %1522 = vmatprep.subr.bf16.mxu0 %v1467
        %1523 = vmatpush1.bf16.msra.mxu0 %v1466
        %1524 = vmatprep.subr.bf16.mxu0 %v1471
        %1525 = vmatpush1.bf16.msra.mxu0 %v1470
        %1526 = vmatprep.subr.bf16.mxu0 %v1475
        %1527 = vmatpush1.bf16.msra.mxu0 %v1474
        %1528 = vmatprep.subr.bf16.mxu0 %v1479
        %1529 = vmatpush1.bf16.msra.mxu0 %v1478
        %1530 = vmatprep.subr.bf16.mxu0 0
        %1531 = vmatpush1.bf16.msra.mxu0 0
        %1532 = vmatprep.subr.bf16.mxu0 0
        %1533 = vmatpush1.bf16.msra.mxu0 0
        %1534 = vmatprep.subr.bf16.mxu0 0
        %1535 = vmatpush1.bf16.msra.mxu0 0
        %1536 = vmatprep.subr.bf16.mxu0 0
        %1537 = vmatpush1.bf16.msra.mxu0 0
        %1538 = vmatprep.subr.bf16.mxu0 0
        %1539 = vmatpush1.bf16.msra.mxu0 0
        %1540 = vmatprep.subr.bf16.mxu0 0
        %1541 = vmatpush1.bf16.msra.mxu0 0
        %1542 = vmatprep.subr.bf16.mxu0 0
        %1543 = vmatpush1.bf16.msra.mxu0 0
        %1544 = vmatprep.subr.bf16.mxu0 0
        %1545 = vmatpush1.bf16.msra.mxu0 0
        %1546 = vmatprep.mubr.bf16.mxu0 0
        %1547 = vmatmul.mubr.bf16.gmra.mrb[0].mxu0 %v1044
        %v1548 = vpop.f32.mrb[0].mxu0
        %v1549 = vadd.f32 %v1307, %v1548
        %v1550 = vpop.f32.mrb[0].mxu0
        %v1551 = vadd.f32 %v1309, %v1550
        %v1552 = vpop.f32.mrb[0].mxu0
        %v1553 = vpop.f32.mrb[0].mxu0
        %1554 = vdwg.mxu0
        %1555 = vmatprep.subr.bf16.mxu0 %v1453
        %1556 = vmatpush1.bf16.msra.mxu0 %v1452
        %1557 = vmatprep.subr.bf16.mxu0 %v1457
        %1558 = vmatpush1.bf16.msra.mxu0 %v1456
        %1559 = vmatprep.subr.bf16.mxu0 %v1461
        %1560 = vmatpush1.bf16.msra.mxu0 %v1460
        %1561 = vmatprep.subr.bf16.mxu0 %v1465
        %1562 = vmatpush1.bf16.msra.mxu0 %v1464
        %1563 = vmatprep.subr.bf16.mxu0 %v1469
        %1564 = vmatpush1.bf16.msra.mxu0 %v1468
        %1565 = vmatprep.subr.bf16.mxu0 %v1473
        %1566 = vmatpush1.bf16.msra.mxu0 %v1472
        %1567 = vmatprep.subr.bf16.mxu0 %v1477
        %1568 = vmatpush1.bf16.msra.mxu0 %v1476
        %1569 = vmatprep.subr.bf16.mxu0 %v1481
        %1570 = vmatpush1.bf16.msra.mxu0 %v1480
        %1571 = vmatprep.subr.bf16.mxu0 0
        %1572 = vmatpush1.bf16.msra.mxu0 0
        %1573 = vmatprep.subr.bf16.mxu0 0
        %1574 = vmatpush1.bf16.msra.mxu0 0
        %1575 = vmatprep.subr.bf16.mxu0 0
        %1576 = vmatpush1.bf16.msra.mxu0 0
        %1577 = vmatprep.subr.bf16.mxu0 0
        %1578 = vmatpush1.bf16.msra.mxu0 0
        %1579 = vmatprep.subr.bf16.mxu0 0
        %1580 = vmatpush1.bf16.msra.mxu0 0
        %1581 = vmatprep.subr.bf16.mxu0 0
        %1582 = vmatpush1.bf16.msra.mxu0 0
        %1583 = vmatprep.subr.bf16.mxu0 0
        %1584 = vmatpush1.bf16.msra.mxu0 0
        %1585 = vmatprep.subr.bf16.mxu0 0
        %1586 = vmatpush1.bf16.msra.mxu0 0
        %1587 = vmatprep.mubr.bf16.mxu0 0
        %1588 = vmatmul.mubr.bf16.gmra.mrb[0].mxu0 %v1044
        %v1589 = vpop.f32.mrb[0].mxu0
        %v1590 = vadd.f32 %v1348, %v1589
        %v1591 = vpop.f32.mrb[0].mxu0
        %v1592 = vadd.f32 %v1350, %v1591
        %v1593 = vpop.f32.mrb[0].mxu0
        %v1594 = vpop.f32.mrb[0].mxu0
        %1595 = vdwg.mxu0
        %v1596 = vld [vmem:[%s6] sm:$0xf]
        %v1598 = vlaneseq
        %v1599 = vshrl.u32 %v1598, 7
        %v1600 = vsub.s32 0, %v1599
        %v1601 = vrot.slane %v1596, %v1600
        %v1602 = vlaneseq
        %v1603 = vshrl.u32 %v1602, 7
        %v1604 = vsub.s32 1, %v1603
        %v1605 = vrot.slane %v1596, %v1604
        %v1606 = vlaneseq
        %v1607 = vshrl.u32 %v1606, 7
        %v1608 = vsub.s32 2, %v1607
        %v1609 = vrot.slane %v1596, %v1608
        %v1610 = vlaneseq
        %v1611 = vshrl.u32 %v1610, 7
        %v1612 = vsub.s32 3, %v1611
        %v1613 = vrot.slane %v1596, %v1612
        %v1618 = vadd.f32 %v1549, %v1601
        %v1619 = vadd.f32 %v1551, %v1605
        %v1620 = vadd.f32 %v1590, %v1609
        %v1621 = vadd.f32 %v1592, %v1613
        %v1622 = vxor.u32 %v1618, 2147483648
        %v1623 = vxor.u32 %v1619, 2147483648
        %v1624 = vxor.u32 %v1620, 2147483648
        %v1625 = vxor.u32 %v1621, 2147483648
        %v1626 = vmul.f32 %v1622, 1.442695
        %v1627 = vpow.pop %v1626
        %v1628 = vmul.f32 %v1623, 1.442695
        %v1629 = vpow.pop %v1628
        %v1630 = vmul.f32 %v1624, 1.442695
        %v1631 = vpow.pop %v1630
        %v1632 = vmul.f32 %v1625, 1.442695
        %v1633 = vpow.pop %v1632
        %v1634 = vadd.f32 %v1627, 1.0
        %v1635 = vadd.f32 %v1629, 1.0
        %v1636 = vadd.f32 %v1631, 1.0
        %v1637 = vadd.f32 %v1633, 1.0
        %v1638 = vrcp.pop %v1634
        %v1639 = vmul.f32 1.0, %v1638
        %v1640 = vrcp.pop %v1635
        %v1641 = vmul.f32 1.0, %v1640
        %v1642 = vrcp.pop %v1636
        %v1643 = vmul.f32 1.0, %v1642
        %v1644 = vrcp.pop %v1637
        %v1645 = vmul.f32 1.0, %v1644
        %v1646 = vmul.f32 %v1643, 2.0
        %v1647 = vsub.f32 %v1646, 1.0
        %s1648 = scalar_lea.vmem [#allocation3], 8
        %v1649 = vld [vmem:[%s1648] sm:$0xff]
        %v1650 = vmul.f32 %v1641, %v1649
        %v1651 = vmul.f32 %v1639, %v1647
        %v1652 = vadd.f32 %v1650, %v1651
        %v1653 = vtanh.pop %v1652
        %v1654 = vmul.f32 %v1645, %v1653
        %1655 = vst [vmem:[%s1648] sm:$0xff] %v1652
        %1656 = vst [vmem:[%s1077] sm:$0xff] %v1654
        %v1657 = vpack.c.bf16 %v1654, %v1654
        %v1658 = vld [vmem:[#allocation12] sm:$0xf]
        %v1659 = vld [vmem:[#allocation12 + $0x4] sm:$0xf]
        %v1660 = vld [vmem:[#allocation12 + $0x8] sm:$0xf]
        %v1661 = vld [vmem:[#allocation12 + $0xc] sm:$0xf]
        %v1662 = vld [vmem:[#allocation12 + $0x10] sm:$0xf]
        %v1663 = vld [vmem:[#allocation12 + $0x14] sm:$0xf]
        %v1664 = vld [vmem:[#allocation12 + $0x18] sm:$0xf]
        %v1665 = vld [vmem:[#allocation12 + $0x1c] sm:$0xf]
        %v1666 = vld [vmem:[#allocation12 + $0x20] sm:$0xf]
        %v1667 = vld [vmem:[#allocation12 + $0x24] sm:$0xf]
        %v1668 = vld [vmem:[#allocation12 + $0x28] sm:$0xf]
        %v1669 = vld [vmem:[#allocation12 + $0x2c] sm:$0xf]
        %v1670 = vld [vmem:[#allocation12 + $0x30] sm:$0xf]
        %v1671 = vld [vmem:[#allocation12 + $0x34] sm:$0xf]
        %v1672 = vld [vmem:[#allocation12 + $0x38] sm:$0xf]
        %v1673 = vld [vmem:[#allocation12 + $0x3c] sm:$0xf]
        %v1674 = vld [vmem:[%s8] sm:$0x1]
        %v1676 = vlaneseq
        %v1677 = vshrl.u32 %v1676, 7
        %v1678 = vsub.s32 0, %v1677
        %v1679 = vrot.slane %v1674, %v1678
        %v1697 = vunpack.c.l.b16 %v1658
        %v1698 = vunpack.c.l.b16 %v1659
        %v1699 = vunpack.c.l.b16 %v1660
        %v1700 = vunpack.c.l.b16 %v1661
        %v1701 = vunpack.c.l.b16 %v1662
        %v1702 = vunpack.c.l.b16 %v1663
        %v1703 = vunpack.c.l.b16 %v1664
        %v1704 = vunpack.c.l.b16 %v1665
        %v1705 = vunpack.c.l.b16 %v1666
        %v1706 = vunpack.c.l.b16 %v1667
        %v1707 = vunpack.c.l.b16 %v1668
        %v1708 = vunpack.c.l.b16 %v1669
        %v1709 = vunpack.c.l.b16 %v1670
        %v1710 = vunpack.c.l.b16 %v1671
        %v1711 = vunpack.c.l.b16 %v1672
        %v1712 = vunpack.c.l.b16 %v1673
        %v1713 = vpack.c.b16 %v1698, %v1697
        %v1714 = vpack.c.b16 %v1700, %v1699
        %v1715 = vpack.c.b16 %v1702, %v1701
        %v1716 = vpack.c.b16 %v1704, %v1703
        %v1717 = vpack.c.b16 %v1706, %v1705
        %v1718 = vpack.c.b16 %v1708, %v1707
        %v1719 = vpack.c.b16 %v1710, %v1709
        %v1720 = vpack.c.b16 %v1712, %v1711
        %1729 = vmatprep.subr.bf16.mxu0 0
        %1730 = vmatpush1.bf16.msra.mxu0 %v1713
        %1731 = vmatprep.subr.bf16.mxu0 0
        %1732 = vmatpush1.bf16.msra.mxu0 %v1714
        %1733 = vmatprep.subr.bf16.mxu0 0
        %1734 = vmatpush1.bf16.msra.mxu0 %v1715
        %1735 = vmatprep.subr.bf16.mxu0 0
        %1736 = vmatpush1.bf16.msra.mxu0 %v1716
        %1737 = vmatprep.subr.bf16.mxu0 0
        %1738 = vmatpush1.bf16.msra.mxu0 %v1717
        %1739 = vmatprep.subr.bf16.mxu0 0
        %1740 = vmatpush1.bf16.msra.mxu0 %v1718
        %1741 = vmatprep.subr.bf16.mxu0 0
        %1742 = vmatpush1.bf16.msra.mxu0 %v1719
        %1743 = vmatprep.subr.bf16.mxu0 0
        %1744 = vmatpush1.bf16.msra.mxu0 %v1720
        %1745 = vmatprep.subr.bf16.mxu0 0
        %1746 = vmatpush1.bf16.msra.mxu0 0
        %1747 = vmatprep.subr.bf16.mxu0 0
        %1748 = vmatpush1.bf16.msra.mxu0 0
        %1749 = vmatprep.subr.bf16.mxu0 0
        %1750 = vmatpush1.bf16.msra.mxu0 0
        %1751 = vmatprep.subr.bf16.mxu0 0
        %1752 = vmatpush1.bf16.msra.mxu0 0
        %1753 = vmatprep.subr.bf16.mxu0 0
        %1754 = vmatpush1.bf16.msra.mxu0 0
        %1755 = vmatprep.subr.bf16.mxu0 0
        %1756 = vmatpush1.bf16.msra.mxu0 0
        %1757 = vmatprep.subr.bf16.mxu0 0
        %1758 = vmatpush1.bf16.msra.mxu0 0
        %1759 = vmatprep.subr.bf16.mxu0 0
        %1760 = vmatpush1.bf16.msra.mxu0 0
        %1761 = vmatprep.mubr.bf16.mxu0 0
        %1762 = vmatmul.mubr.bf16.gmra.mrb[0].mxu0 %v1657
        %v1763 = vpop.f32.mrb[0].mxu0
        %v1764 = vadd.f32 %v1679, %v1763
        %v1765 = vpop.f32.mrb[0].mxu0
        %v1766 = vpop.f32.mrb[0].mxu0
        %v1767 = vpop.f32.mrb[0].mxu0
        %1768 = vdwg.mxu0
        %1769 = vst [vmem:[%s420] sm:$0xff] %v1764
        %1770 = vst [vmem:[#allocation4] sm:$0xff] %v1764
        %p1771 = scmp.lt.s32.totalorder %s28, 1
        %s1772 = scalar_select %p1771, %s28, 1
        %p1773 = scmp.lt.s32.totalorder %s27, 0
        %s1774 = scalar_select %p1773, %s27, 0
        %s1775 = sadd.s32 %s1774, %s1772
        %s1776 = smul.addr %s1775, 8
        %s1777 = scalar_lea.vmem %s9, %s1776
        // Predicated region
        $region81: #{lstm_forward.1} parent=55 // pred_check
          %p1778 = pneg %p249
        $region82: #{lstm_forward.1} parent=55 // pred_check_branch
          %1780 = sbr.rel (%p1778) target = $region84
        $region83: #{lstm_forward.1} parent=55 // pred_region
          _
        $region84: #{lstm_forward.1} parent=55 // pred_fallthru
          _
      $region56: #{lstm_forward.1} parent=5 // pred_fallthru
        _
      %p1781 = scmp.le.s32.totalorder 2, %s18
      // Predicated region
      $region85: #{lstm_forward.1} parent=5 // pred_check
        %p1782 = pneg %p1781
      $region86: #{lstm_forward.1} parent=5 // pred_check_branch
        %1784 = sbr.rel (%p1782) target = $region88
      $region87: #{lstm_forward.1} parent=5 // pred_region
        %s1785 = ssub.s32 %s18, 2
        // Predicated region
        $region89: #{lstm_forward.1} parent=87 // pred_check
          %p1786 = pneg %p255
        $region90: #{lstm_forward.1} parent=87 // pred_check_branch
          %1788 = sbr.rel (%p1786) target = $region92
        $region91: #{lstm_forward.1} parent=87 // pred_region
          %p1789 = scmp.lt.s32.totalorder %s30, 1
          %s1790 = scalar_select %p1789, %s30, 1
          %p1791 = scmp.lt.s32.totalorder %s29, 0
          %s1792 = scalar_select %p1791, %s29, 0
          %s1793 = sadd.s32 %s1792, %s1790
          %s1794 = smul.addr %s1793, 8
          %s1795 = scalar_lea.vmem %s9, %s1794
        $region92: #{lstm_forward.1} parent=87 // pred_fallthru
          _
      $region88: #{lstm_forward.1} parent=5 // pred_fallthru
        _
    $region6: #{lstm_forward.1} parent=1 // loop_footer
      %s22 = sadd.s32 1, %s18
    $region7: #{lstm_forward.1} parent=1 // loop_footer_branch
      %17 = sbr.rel target = $region3
    $region8: #{lstm_forward.1} parent=1 // loop_exit
      _
    %1796 = vsyncpa [#allocation6], 1
    %s1797 = scalar_lea.sflag [#allocation6], 1
    %1798 = vsyncpa %s1797, 1
    %1799 = vsyncpa [#allocation8], 1
    %1800 = vsyncpa [#allocation11], 1

</llo_original>
